<compile_context>
chip_gen: v5e
topology: v5e:2x2
jax: 0.10.0
libtpu: 0.0.40
codegen_flags: <defaults>
</compile_context>

<pallas_src>
import jax
import jax.numpy as jnp
from jax.experimental import pallas as pl
from jax.experimental.pallas import tpu as pltpu


# ----------------------------------------------------------------------------
# Fused kernel builder
# ----------------------------------------------------------------------------
def _build_fused_kernel(*, N, L, cin0, channels, K, dils, padmax, lpad, out_dim):
    """Kernel layout (time-major): activations are (N*lpad, C) in VMEM scratch,
    rows = [pad | data] per batch item, channels on lanes."""
    nl = N * L
    has_down = []
    c = cin0
    for cout in channels:
        has_down.append(c != cout)
        c = cout

    def drow(n):  # first row of the (unpadded) data region of batch item n
        return n * lpad + padmax

    def kernel(*refs):
        x_ref = refs[0]
        o_ref = refs[-4]
        a_ref, h_ref, slab_ref = refs[-3:]
        w_refs = refs[1:-4]

        # Zero both padded activation slabs once: the first `padmax` rows of
        # every batch segment stay zero forever -> causal left padding.
        a_ref[...] = jnp.zeros_like(a_ref)
        h_ref[...] = jnp.zeros_like(h_ref)

        # Load the (already time-major) input into A's data region.
        for n in range(N):
            a_ref[drow(n):drow(n) + L, 0:cin0] = x_ref[n]

        def build_slab(src_ref, cin, dil):
            # im2col: one (N*L, K*cin) slab -> a single MXU matmul per conv.
            for k in range(K):
                off = padmax - (K - 1 - k) * dil   # static; negative taps read
                for n in range(N):                 # the zeroed pad rows
                    slab_ref[n * L:(n + 1) * L, k * cin:(k + 1) * cin] = (
                        src_ref[n * lpad + off:n * lpad + off + L, 0:cin])
            return slab_ref[0:nl, 0:K * cin]

        wi = 0
        cin = cin0
        for bi, cout in enumerate(channels):
            dil = dils[bi]
            w1, b1 = w_refs[wi][...], w_refs[wi + 1][...]
            w2, b2 = w_refs[wi + 2][...], w_refs[wi + 3][...]
            wi += 4

            # conv1 -> ReLU  (dropout is eval-mode identity)
            s1 = build_slab(a_ref, cin, dil)
            h1 = jnp.maximum(
                jnp.dot(s1, w1, preferred_element_type=jnp.float32) + b1, 0.0)

            # Residual path reads the block input; its unshifted copy is the
            # last im2col tap of s1 (no extra gather, stays in VMEM/vregs).
            x_blk = s1[:, (K - 1) * cin:K * cin]            # (N*L, cin)
            if has_down[bi]:
                wd, bd = w_refs[wi][...], w_refs[wi + 1][...]
                wi += 2
                res = jnp.dot(x_blk, wd, preferred_element_type=jnp.float32) + bd
            else:
                res = x_blk

            # Stage h1 into the padded slab H so conv2's im2col sees the
            # causal zero padding.
            for n in range(N):
                h_ref[drow(n):drow(n) + L, 0:cout] = h1[n * L:(n + 1) * L, :]

            # conv2 -> ReLU, then fused residual add -> ReLU.
            s2 = build_slab(h_ref, cout, dil)
            h2 = jnp.maximum(
                jnp.dot(s2, w2, preferred_element_type=jnp.float32) + b2, 0.0)
            out = jnp.maximum(h2 + res, 0.0)
            for n in range(N):
                a_ref[drow(n):drow(n) + L, 0:cout] = out[n * L:(n + 1) * L, :]
            cin = cout

        # Head: relu(linear(last timestep)) — fused, no separate pallas_call.
        wl, bl = w_refs[wi][...], w_refs[wi + 1][...]
        clast = channels[-1]
        for n in range(N):
            r = drow(n) + L - 1
            slab_ref[n:n + 1, 0:clast] = a_ref[r:r + 1, 0:clast]
        last = slab_ref[0:N, 0:clast]                        # (N, C_last)
        y = jnp.dot(last, wl, preferred_element_type=jnp.float32) + bl
        o_ref[...] = jnp.maximum(y, 0.0)

    return kernel


# ----------------------------------------------------------------------------
# Forward wrapper (single pallas_call; only glue is one tiny input transpose)
# ----------------------------------------------------------------------------
def make_tcn_forward(input_dim, output_dim, seq_len, num_channels, kernel_size):
    K = kernel_size
    dils = [2 ** i for i in range(len(num_channels))]
    padmax = (K - 1) * dils[-1]
    cmax = max(num_channels)

    def forward(x, flat_params):
        if seq_len is not None and x.shape[-1] > seq_len:
            x = x[:, :, -seq_len:]
        N, cin0, L = x.shape
        lpad = padmax + L
        x_t = jnp.transpose(x, (0, 2, 1))        # (N, L, Cin) time-major

        kernel = _build_fused_kernel(
            N=N, L=L, cin0=cin0, channels=num_channels, K=K, dils=dils,
            padmax=padmax, lpad=lpad, out_dim=output_dim)

        # Advisory cost estimate for XLA's scheduler.
        flops = 0
        c = cin0
        for cout in num_channels:
            flops += 2 * N * L * (K * c) * cout + 2 * N * L * (K * cout) * cout
            if c != cout:
                flops += 2 * N * L * c * cout
            c = cout
        flops += 2 * N * num_channels[-1] * output_dim
        bytes_accessed = 4 * (x_t.size + sum(int(a.size) for a in flat_params)
                              + N * output_dim)

        return pl.pallas_call(
            kernel,
            out_shape=jax.ShapeDtypeStruct((N, output_dim), jnp.float32),
            scratch_shapes=[
                pltpu.VMEM((N * lpad, cmax), jnp.float32),   # A: block in/out
                pltpu.VMEM((N * lpad, cmax), jnp.float32),   # H: conv1 act
                pltpu.VMEM((N * L, K * cmax), jnp.float32),  # im2col slab
            ],
            cost_estimate=pl.CostEstimate(
                flops=int(flops), transcendentals=0,
                bytes_accessed=int(bytes_accessed)),
        )(x_t, *flat_params)

    return forward


# ----------------------------------------------------------------------------
# Parameters: deterministic torch-layout init + one-time fold for the kernel
# ----------------------------------------------------------------------------
def init_params(key, input_dim, num_channels, kernel_size, output_dim):
    """Deterministic init in PyTorch (Cout, Cin, K) layout (weight_norm folded)."""
    def uniform(k, shape, bound):
        return jax.random.uniform(k, shape, jnp.float32, -bound, bound)

    params = {"blocks": []}
    cin = input_dim
    keys = jax.random.split(key, 6 * len(num_channels) + 2)
    ki = 0
    for cout in num_channels:
        b1 = (1.0 / (cin * kernel_size)) ** 0.5
        b2 = (1.0 / (cout * kernel_size)) ** 0.5
        blk = {
            "w1": uniform(keys[ki], (cout, cin, kernel_size), b1),
            "b1": uniform(keys[ki + 1], (cout,), b1),
            "w2": uniform(keys[ki + 2], (cout, cout, kernel_size), b2),
            "b2": uniform(keys[ki + 3], (cout,), b2),
        }
        if cin != cout:
            bd = (1.0 / cin) ** 0.5
            blk["w_down"] = uniform(keys[ki + 4], (cout, cin, 1), bd)
            blk["b_down"] = uniform(keys[ki + 5], (cout,), bd)
        else:
            blk["w_down"] = None
            blk["b_down"] = None
        params["blocks"].append(blk)
        cin = cout
        ki += 6
    bl = (1.0 / cin) ** 0.5
    params["lin_w"] = uniform(keys[ki], (output_dim, cin), bl)
    params["lin_b"] = uniform(keys[ki + 1], (output_dim,), bl)
    return params


def fold_params(params, kernel_size):
    """One-time prep: fold torch-layout weights into im2col matmul form."""
    K = kernel_size
    flat = []
    for blk in params["blocks"]:
        cout, cin, _ = blk["w1"].shape
        flat.append(jnp.transpose(blk["w1"], (2, 1, 0)).reshape(K * cin, cout))
        flat.append(blk["b1"].reshape(1, cout))
        flat.append(jnp.transpose(blk["w2"], (2, 1, 0)).reshape(K * cout, cout))
        flat.append(blk["b2"].reshape(1, cout))
        if blk["w_down"] is not None:
            flat.append(jnp.transpose(blk["w_down"][:, :, 0]))   # (cin, cout)
            flat.append(blk["b_down"].reshape(1, cout))
    flat.append(jnp.transpose(params["lin_w"]))                  # (C_last, O)
    flat.append(params["lin_b"].reshape(1, -1))
    return tuple(flat)


# ----------------------------------------------------------------------------
# Pure-JAX reference (for a numerical sanity check)
# ----------------------------------------------------------------------------
def reference_forward(x, params, seq_len):
    if seq_len is not None and x.shape[-1] > seq_len:
        x = x[:, :, -seq_len:]

    def cconv(inp, w, b, dil):
        K = w.shape[-1]
        pad = (K - 1) * dil
        xp = jnp.pad(inp, ((0, 0), (0, 0), (pad, 0)))
        out = jax.lax.conv_general_dilated(
            xp, w, window_strides=(1,), padding="VALID", rhs_dilation=(dil,),
            dimension_numbers=("NCH", "OIH", "NCH"),
            precision=jax.lax.Precision.HIGHEST)
        return out + b[None, :, None]

    h = x
    for i, blk in enumerate(params["blocks"]):
        dil = 2 ** i
        h1 = jax.nn.relu(cconv(h, blk["w1"], blk["b1"], dil))
        h2 = jax.nn.relu(cconv(h1, blk["w2"], blk["b2"], dil))
        res = h if blk["w_down"] is None else cconv(h, blk["w_down"],
                                                    blk["b_down"], 1)
        h = jax.nn.relu(h2 + res)
    last = h[:, :, -1]
    y = jnp.dot(last, params["lin_w"].T,
                precision=jax.lax.Precision.HIGHEST) + params["lin_b"]
    return jax.nn.relu(y)


if __name__ == "__main__":
    # Config consistent with TCNModel defaults:
    # input_dim=4, output_dim=3, seq_len=16, num_channels=[32,64,64], K=6
    batch, input_dim, seq_len, output_dim = 2, 4, 16, 3
    num_channels = [32, 64, 64]
    kernel_size = 6

    key = jax.random.PRNGKey(0)
    pkey, xkey = jax.random.split(key)
    params = init_params(pkey, input_dim, num_channels, kernel_size, output_dim)
    flat = fold_params(params, kernel_size)
    x = jax.random.normal(xkey, (batch, input_dim, seq_len), jnp.float32)

    fwd = jax.jit(make_tcn_forward(input_dim, output_dim, seq_len,
                                   num_channels, kernel_size))
    out = fwd(x, flat)
    jax.block_until_ready(out)

    ref = reference_forward(x, params, seq_len)
    assert out.shape == (batch, output_dim), out.shape
    assert bool(jnp.all(out >= 0.0)), "output ReLU violated"
    assert bool(jnp.allclose(out, ref, rtol=1e-3, atol=1e-3)), (out, ref)
    print("KERNEL_OK")
</pallas_src>

<mosaic_0001>
module attributes {stable_mosaic.version = 11 : i64} {
  func.func @kernel(%arg0: memref<2x16x4xf32, #tpu.memory_space<vmem>>, %arg1: memref<24x32xf32, #tpu.memory_space<vmem>>, %arg2: memref<1x32xf32, #tpu.memory_space<vmem>>, %arg3: memref<192x32xf32, #tpu.memory_space<vmem>>, %arg4: memref<1x32xf32, #tpu.memory_space<vmem>>, %arg5: memref<4x32xf32, #tpu.memory_space<vmem>>, %arg6: memref<1x32xf32, #tpu.memory_space<vmem>>, %arg7: memref<192x64xf32, #tpu.memory_space<vmem>>, %arg8: memref<1x64xf32, #tpu.memory_space<vmem>>, %arg9: memref<384x64xf32, #tpu.memory_space<vmem>>, %arg10: memref<1x64xf32, #tpu.memory_space<vmem>>, %arg11: memref<32x64xf32, #tpu.memory_space<vmem>>, %arg12: memref<1x64xf32, #tpu.memory_space<vmem>>, %arg13: memref<384x64xf32, #tpu.memory_space<vmem>>, %arg14: memref<1x64xf32, #tpu.memory_space<vmem>>, %arg15: memref<384x64xf32, #tpu.memory_space<vmem>>, %arg16: memref<1x64xf32, #tpu.memory_space<vmem>>, %arg17: memref<64x3xf32, #tpu.memory_space<vmem>>, %arg18: memref<1x3xf32, #tpu.memory_space<vmem>>, %arg19: memref<2x3xf32, #tpu.memory_space<vmem>>, %arg20: memref<72x64xf32, #tpu.memory_space<vmem>>, %arg21: memref<72x64xf32, #tpu.memory_space<vmem>>, %arg22: memref<32x384xf32, #tpu.memory_space<vmem>>) attributes {dimension_semantics = [], scalar_prefetch = 0 : i64, scratch_operands = 3 : i64, tpu.core_type = #tpu.core_type<tc>} {
    %cst = arith.constant 0.000000e+00 : f32
    %0 = vector.broadcast %cst : f32 to vector<72x64xf32>
    %c0 = arith.constant 0 : index
    %c0_0 = arith.constant 0 : index
    %1 = vector.load %arg20[%c0, %c0_0] : memref<72x64xf32, #tpu.memory_space<vmem>>, vector<72x64xf32>
    tpu.vector_store %arg20[%c0, %c0_0], %0 {strides = array<i32>} : memref<72x64xf32, #tpu.memory_space<vmem>>, vector<72x64xf32>,
    %cst_1 = arith.constant 0.000000e+00 : f32
    %2 = vector.broadcast %cst_1 : f32 to vector<72x64xf32>
    %c0_2 = arith.constant 0 : index
    %c0_3 = arith.constant 0 : index
    %3 = vector.load %arg21[%c0_2, %c0_3] : memref<72x64xf32, #tpu.memory_space<vmem>>, vector<72x64xf32>
    tpu.vector_store %arg21[%c0_2, %c0_3], %2 {strides = array<i32>} : memref<72x64xf32, #tpu.memory_space<vmem>>, vector<72x64xf32>,
    %c0_4 = arith.constant 0 : index
    %c0_5 = arith.constant 0 : index
    %c0_6 = arith.constant 0 : index
    %4 = vector.load %arg0[%c0_4, %c0_5, %c0_6] : memref<2x16x4xf32, #tpu.memory_space<vmem>>, vector<1x16x4xf32>
    %5 = vector.shape_cast %4 : vector<1x16x4xf32> to vector<16x4xf32>
    %c20 = arith.constant 20 : index
    %c0_7 = arith.constant 0 : index
    %6 = vector.load %arg20[%c20, %c0_7] : memref<72x64xf32, #tpu.memory_space<vmem>>, vector<16x4xf32>
    tpu.vector_store %arg20[%c20, %c0_7], %5 {strides = array<i32>} : memref<72x64xf32, #tpu.memory_space<vmem>>, vector<16x4xf32>,
    %c1 = arith.constant 1 : index
    %c0_8 = arith.constant 0 : index
    %c0_9 = arith.constant 0 : index
    %7 = vector.load %arg0[%c1, %c0_8, %c0_9] : memref<2x16x4xf32, #tpu.memory_space<vmem>>, vector<1x16x4xf32>
    %8 = vector.shape_cast %7 : vector<1x16x4xf32> to vector<16x4xf32>
    %c56 = arith.constant 56 : index
    %c0_10 = arith.constant 0 : index
    %9 = vector.load %arg20[%c56, %c0_10] : memref<72x64xf32, #tpu.memory_space<vmem>>, vector<16x4xf32>
    tpu.vector_store %arg20[%c56, %c0_10], %8 {strides = array<i32>} : memref<72x64xf32, #tpu.memory_space<vmem>>, vector<16x4xf32>,
    %c0_11 = arith.constant 0 : index
    %c0_12 = arith.constant 0 : index
    %10 = vector.load %arg1[%c0_11, %c0_12] : memref<24x32xf32, #tpu.memory_space<vmem>>, vector<24x32xf32>
    %c0_13 = arith.constant 0 : index
    %c0_14 = arith.constant 0 : index
    %11 = vector.load %arg2[%c0_13, %c0_14] : memref<1x32xf32, #tpu.memory_space<vmem>>, vector<1x32xf32>
    %c0_15 = arith.constant 0 : index
    %c0_16 = arith.constant 0 : index
    %12 = vector.load %arg3[%c0_15, %c0_16] : memref<192x32xf32, #tpu.memory_space<vmem>>, vector<192x32xf32>
    %c0_17 = arith.constant 0 : index
    %c0_18 = arith.constant 0 : index
    %13 = vector.load %arg4[%c0_17, %c0_18] : memref<1x32xf32, #tpu.memory_space<vmem>>, vector<1x32xf32>
    %c15 = arith.constant 15 : index
    %c0_19 = arith.constant 0 : index
    %14 = vector.load %arg20[%c15, %c0_19] : memref<72x64xf32, #tpu.memory_space<vmem>>, vector<16x4xf32>
    %c0_20 = arith.constant 0 : index
    %c0_21 = arith.constant 0 : index
    %15 = vector.load %arg22[%c0_20, %c0_21] : memref<32x384xf32, #tpu.memory_space<vmem>>, vector<16x4xf32>
    tpu.vector_store %arg22[%c0_20, %c0_21], %14 {strides = array<i32>} : memref<32x384xf32, #tpu.memory_space<vmem>>, vector<16x4xf32>,
    %c51 = arith.constant 51 : index
    %c0_22 = arith.constant 0 : index
    %16 = vector.load %arg20[%c51, %c0_22] : memref<72x64xf32, #tpu.memory_space<vmem>>, vector<16x4xf32>
    %c16 = arith.constant 16 : index
    %c0_23 = arith.constant 0 : index
    %17 = vector.load %arg22[%c16, %c0_23] : memref<32x384xf32, #tpu.memory_space<vmem>>, vector<16x4xf32>
    tpu.vector_store %arg22[%c16, %c0_23], %16 {strides = array<i32>} : memref<32x384xf32, #tpu.memory_space<vmem>>, vector<16x4xf32>,
    %c16_24 = arith.constant 16 : index
    %c0_25 = arith.constant 0 : index
    %18 = vector.load %arg20[%c16_24, %c0_25] : memref<72x64xf32, #tpu.memory_space<vmem>>, vector<16x4xf32>
    %c0_26 = arith.constant 0 : index
    %c4 = arith.constant 4 : index
    %19 = vector.load %arg22[%c0_26, %c4] : memref<32x384xf32, #tpu.memory_space<vmem>>, vector<16x4xf32>
    tpu.vector_store %arg22[%c0_26, %c4], %18 {strides = array<i32>} : memref<32x384xf32, #tpu.memory_space<vmem>>, vector<16x4xf32>,
    %c52 = arith.constant 52 : index
    %c0_27 = arith.constant 0 : index
    %20 = vector.load %arg20[%c52, %c0_27] : memref<72x64xf32, #tpu.memory_space<vmem>>, vector<16x4xf32>
    %c16_28 = arith.constant 16 : index
    %c4_29 = arith.constant 4 : index
    %21 = vector.load %arg22[%c16_28, %c4_29] : memref<32x384xf32, #tpu.memory_space<vmem>>, vector<16x4xf32>
    tpu.vector_store %arg22[%c16_28, %c4_29], %20 {strides = array<i32>} : memref<32x384xf32, #tpu.memory_space<vmem>>, vector<16x4xf32>,
    %c17 = arith.constant 17 : index
    %c0_30 = arith.constant 0 : index
    %22 = vector.load %arg20[%c17, %c0_30] : memref<72x64xf32, #tpu.memory_space<vmem>>, vector<16x4xf32>
    %c0_31 = arith.constant 0 : index
    %c8 = arith.constant 8 : index
    %23 = vector.load %arg22[%c0_31, %c8] : memref<32x384xf32, #tpu.memory_space<vmem>>, vector<16x4xf32>
    tpu.vector_store %arg22[%c0_31, %c8], %22 {strides = array<i32>} : memref<32x384xf32, #tpu.memory_space<vmem>>, vector<16x4xf32>,
    %c53 = arith.constant 53 : index
    %c0_32 = arith.constant 0 : index
    %24 = vector.load %arg20[%c53, %c0_32] : memref<72x64xf32, #tpu.memory_space<vmem>>, vector<16x4xf32>
    %c16_33 = arith.constant 16 : index
    %c8_34 = arith.constant 8 : index
    %25 = vector.load %arg22[%c16_33, %c8_34] : memref<32x384xf32, #tpu.memory_space<vmem>>, vector<16x4xf32>
    tpu.vector_store %arg22[%c16_33, %c8_34], %24 {strides = array<i32>} : memref<32x384xf32, #tpu.memory_space<vmem>>, vector<16x4xf32>,
    %c18 = arith.constant 18 : index
    %c0_35 = arith.constant 0 : index
    %26 = vector.load %arg20[%c18, %c0_35] : memref<72x64xf32, #tpu.memory_space<vmem>>, vector<16x4xf32>
    %c0_36 = arith.constant 0 : index
    %c12 = arith.constant 12 : index
    %27 = vector.load %arg22[%c0_36, %c12] : memref<32x384xf32, #tpu.memory_space<vmem>>, vector<16x4xf32>
    tpu.vector_store %arg22[%c0_36, %c12], %26 {strides = array<i32>} : memref<32x384xf32, #tpu.memory_space<vmem>>, vector<16x4xf32>,
    %c54 = arith.constant 54 : index
    %c0_37 = arith.constant 0 : index
    %28 = vector.load %arg20[%c54, %c0_37] : memref<72x64xf32, #tpu.memory_space<vmem>>, vector<16x4xf32>
    %c16_38 = arith.constant 16 : index
    %c12_39 = arith.constant 12 : index
    %29 = vector.load %arg22[%c16_38, %c12_39] : memref<32x384xf32, #tpu.memory_space<vmem>>, vector<16x4xf32>
    tpu.vector_store %arg22[%c16_38, %c12_39], %28 {strides = array<i32>} : memref<32x384xf32, #tpu.memory_space<vmem>>, vector<16x4xf32>,
    %c19 = arith.constant 19 : index
    %c0_40 = arith.constant 0 : index
    %30 = vector.load %arg20[%c19, %c0_40] : memref<72x64xf32, #tpu.memory_space<vmem>>, vector<16x4xf32>
    %c0_41 = arith.constant 0 : index
    %c16_42 = arith.constant 16 : index
    %31 = vector.load %arg22[%c0_41, %c16_42] : memref<32x384xf32, #tpu.memory_space<vmem>>, vector<16x4xf32>
    tpu.vector_store %arg22[%c0_41, %c16_42], %30 {strides = array<i32>} : memref<32x384xf32, #tpu.memory_space<vmem>>, vector<16x4xf32>,
    %c55 = arith.constant 55 : index
    %c0_43 = arith.constant 0 : index
    %32 = vector.load %arg20[%c55, %c0_43] : memref<72x64xf32, #tpu.memory_space<vmem>>, vector<16x4xf32>
    %c16_44 = arith.constant 16 : index
    %c16_45 = arith.constant 16 : index
    %33 = vector.load %arg22[%c16_44, %c16_45] : memref<32x384xf32, #tpu.memory_space<vmem>>, vector<16x4xf32>
    tpu.vector_store %arg22[%c16_44, %c16_45], %32 {strides = array<i32>} : memref<32x384xf32, #tpu.memory_space<vmem>>, vector<16x4xf32>,
    %c20_46 = arith.constant 20 : index
    %c0_47 = arith.constant 0 : index
    %34 = vector.load %arg20[%c20_46, %c0_47] : memref<72x64xf32, #tpu.memory_space<vmem>>, vector<16x4xf32>
    %c0_48 = arith.constant 0 : index
    %c20_49 = arith.constant 20 : index
    %35 = vector.load %arg22[%c0_48, %c20_49] : memref<32x384xf32, #tpu.memory_space<vmem>>, vector<16x4xf32>
    tpu.vector_store %arg22[%c0_48, %c20_49], %34 {strides = array<i32>} : memref<32x384xf32, #tpu.memory_space<vmem>>, vector<16x4xf32>,
    %c56_50 = arith.constant 56 : index
    %c0_51 = arith.constant 0 : index
    %36 = vector.load %arg20[%c56_50, %c0_51] : memref<72x64xf32, #tpu.memory_space<vmem>>, vector<16x4xf32>
    %c16_52 = arith.constant 16 : index
    %c20_53 = arith.constant 20 : index
    %37 = vector.load %arg22[%c16_52, %c20_53] : memref<32x384xf32, #tpu.memory_space<vmem>>, vector<16x4xf32>
    tpu.vector_store %arg22[%c16_52, %c20_53], %36 {strides = array<i32>} : memref<32x384xf32, #tpu.memory_space<vmem>>, vector<16x4xf32>,
    %c0_54 = arith.constant 0 : index
    %c0_55 = arith.constant 0 : index
    %38 = vector.load %arg22[%c0_54, %c0_55] : memref<32x384xf32, #tpu.memory_space<vmem>>, vector<32x24xf32>
    %cst_56 = arith.constant dense<0.000000e+00> : vector<32x32xf32>
    %39 = tpu.matmul %38, %10, %cst_56 {dimension_numbers = #tpu.dot_dimension_numbers<[1], [0], [0], [1], [0, 0, 1, 1], [], []>} : vector<32x24xf32>, vector<24x32xf32>, vector<32x32xf32> -> vector<32x32xf32>
    %40 = vector.broadcast %11 : vector<1x32xf32> to vector<32x32xf32>
    %41 = arith.addf %39, %40 : vector<32x32xf32>
    %cst_57 = arith.constant 0.000000e+00 : f32
    %42 = vector.broadcast %cst_57 : f32 to vector<32x32xf32>
    %43 = arith.maximumf %41, %42 : vector<32x32xf32>
    %44 = vector.extract_strided_slice %38 {offsets = [0, 20], sizes = [32, 4], strides = [1, 1]} : vector<32x24xf32> to vector<32x4xf32>
    %c0_58 = arith.constant 0 : index
    %c0_59 = arith.constant 0 : index
    %45 = vector.load %arg5[%c0_58, %c0_59] : memref<4x32xf32, #tpu.memory_space<vmem>>, vector<4x32xf32>
    %c0_60 = arith.constant 0 : index
    %c0_61 = arith.constant 0 : index
    %46 = vector.load %arg6[%c0_60, %c0_61] : memref<1x32xf32, #tpu.memory_space<vmem>>, vector<1x32xf32>
    %cst_62 = arith.constant dense<0.000000e+00> : vector<32x32xf32>
    %47 = tpu.matmul %44, %45, %cst_62 {dimension_numbers = #tpu.dot_dimension_numbers<[1], [0], [0], [1], [0, 0, 1, 1], [], []>} : vector<32x4xf32>, vector<4x32xf32>, vector<32x32xf32> -> vector<32x32xf32>
    %48 = vector.broadcast %46 : vector<1x32xf32> to vector<32x32xf32>
    %49 = arith.addf %47, %48 : vector<32x32xf32>
    %50 = vector.extract_strided_slice %43 {offsets = [0, 0], sizes = [16, 32], strides = [1, 1]} : vector<32x32xf32> to vector<16x32xf32>
    %c20_63 = arith.constant 20 : index
    %c0_64 = arith.constant 0 : index
    %51 = vector.load %arg21[%c20_63, %c0_64] : memref<72x64xf32, #tpu.memory_space<vmem>>, vector<16x32xf32>
    tpu.vector_store %arg21[%c20_63, %c0_64], %50 {strides = array<i32>} : memref<72x64xf32, #tpu.memory_space<vmem>>, vector<16x32xf32>,
    %52 = vector.extract_strided_slice %43 {offsets = [16, 0], sizes = [16, 32], strides = [1, 1]} : vector<32x32xf32> to vector<16x32xf32>
    %c56_65 = arith.constant 56 : index
    %c0_66 = arith.constant 0 : index
    %53 = vector.load %arg21[%c56_65, %c0_66] : memref<72x64xf32, #tpu.memory_space<vmem>>, vector<16x32xf32>
    tpu.vector_store %arg21[%c56_65, %c0_66], %52 {strides = array<i32>} : memref<72x64xf32, #tpu.memory_space<vmem>>, vector<16x32xf32>,
    %c15_67 = arith.constant 15 : index
    %c0_68 = arith.constant 0 : index
    %54 = vector.load %arg21[%c15_67, %c0_68] : memref<72x64xf32, #tpu.memory_space<vmem>>, vector<16x32xf32>
    %c0_69 = arith.constant 0 : index
    %c0_70 = arith.constant 0 : index
    %55 = vector.load %arg22[%c0_69, %c0_70] : memref<32x384xf32, #tpu.memory_space<vmem>>, vector<16x32xf32>
    tpu.vector_store %arg22[%c0_69, %c0_70], %54 {strides = array<i32>} : memref<32x384xf32, #tpu.memory_space<vmem>>, vector<16x32xf32>,
    %c51_71 = arith.constant 51 : index
    %c0_72 = arith.constant 0 : index
    %56 = vector.load %arg21[%c51_71, %c0_72] : memref<72x64xf32, #tpu.memory_space<vmem>>, vector<16x32xf32>
    %c16_73 = arith.constant 16 : index
    %c0_74 = arith.constant 0 : index
    %57 = vector.load %arg22[%c16_73, %c0_74] : memref<32x384xf32, #tpu.memory_space<vmem>>, vector<16x32xf32>
    tpu.vector_store %arg22[%c16_73, %c0_74], %56 {strides = array<i32>} : memref<32x384xf32, #tpu.memory_space<vmem>>, vector<16x32xf32>,
    %c16_75 = arith.constant 16 : index
    %c0_76 = arith.constant 0 : index
    %58 = vector.load %arg21[%c16_75, %c0_76] : memref<72x64xf32, #tpu.memory_space<vmem>>, vector<16x32xf32>
    %c0_77 = arith.constant 0 : index
    %c32 = arith.constant 32 : index
    %59 = vector.load %arg22[%c0_77, %c32] : memref<32x384xf32, #tpu.memory_space<vmem>>, vector<16x32xf32>
    tpu.vector_store %arg22[%c0_77, %c32], %58 {strides = array<i32>} : memref<32x384xf32, #tpu.memory_space<vmem>>, vector<16x32xf32>,
    %c52_78 = arith.constant 52 : index
    %c0_79 = arith.constant 0 : index
    %60 = vector.load %arg21[%c52_78, %c0_79] : memref<72x64xf32, #tpu.memory_space<vmem>>, vector<16x32xf32>
    %c16_80 = arith.constant 16 : index
    %c32_81 = arith.constant 32 : index
    %61 = vector.load %arg22[%c16_80, %c32_81] : memref<32x384xf32, #tpu.memory_space<vmem>>, vector<16x32xf32>
    tpu.vector_store %arg22[%c16_80, %c32_81], %60 {strides = array<i32>} : memref<32x384xf32, #tpu.memory_space<vmem>>, vector<16x32xf32>,
    %c17_82 = arith.constant 17 : index
    %c0_83 = arith.constant 0 : index
    %62 = vector.load %arg21[%c17_82, %c0_83] : memref<72x64xf32, #tpu.memory_space<vmem>>, vector<16x32xf32>
    %c0_84 = arith.constant 0 : index
    %c64 = arith.constant 64 : index
    %63 = vector.load %arg22[%c0_84, %c64] : memref<32x384xf32, #tpu.memory_space<vmem>>, vector<16x32xf32>
    tpu.vector_store %arg22[%c0_84, %c64], %62 {strides = array<i32>} : memref<32x384xf32, #tpu.memory_space<vmem>>, vector<16x32xf32>,
    %c53_85 = arith.constant 53 : index
    %c0_86 = arith.constant 0 : index
    %64 = vector.load %arg21[%c53_85, %c0_86] : memref<72x64xf32, #tpu.memory_space<vmem>>, vector<16x32xf32>
    %c16_87 = arith.constant 16 : index
    %c64_88 = arith.constant 64 : index
    %65 = vector.load %arg22[%c16_87, %c64_88] : memref<32x384xf32, #tpu.memory_space<vmem>>, vector<16x32xf32>
    tpu.vector_store %arg22[%c16_87, %c64_88], %64 {strides = array<i32>} : memref<32x384xf32, #tpu.memory_space<vmem>>, vector<16x32xf32>,
    %c18_89 = arith.constant 18 : index
    %c0_90 = arith.constant 0 : index
    %66 = vector.load %arg21[%c18_89, %c0_90] : memref<72x64xf32, #tpu.memory_space<vmem>>, vector<16x32xf32>
    %c0_91 = arith.constant 0 : index
    %c96 = arith.constant 96 : index
    %67 = vector.load %arg22[%c0_91, %c96] : memref<32x384xf32, #tpu.memory_space<vmem>>, vector<16x32xf32>
    tpu.vector_store %arg22[%c0_91, %c96], %66 {strides = array<i32>} : memref<32x384xf32, #tpu.memory_space<vmem>>, vector<16x32xf32>,
    %c54_92 = arith.constant 54 : index
    %c0_93 = arith.constant 0 : index
    %68 = vector.load %arg21[%c54_92, %c0_93] : memref<72x64xf32, #tpu.memory_space<vmem>>, vector<16x32xf32>
    %c16_94 = arith.constant 16 : index
    %c96_95 = arith.constant 96 : index
    %69 = vector.load %arg22[%c16_94, %c96_95] : memref<32x384xf32, #tpu.memory_space<vmem>>, vector<16x32xf32>
    tpu.vector_store %arg22[%c16_94, %c96_95], %68 {strides = array<i32>} : memref<32x384xf32, #tpu.memory_space<vmem>>, vector<16x32xf32>,
    %c19_96 = arith.constant 19 : index
    %c0_97 = arith.constant 0 : index
    %70 = vector.load %arg21[%c19_96, %c0_97] : memref<72x64xf32, #tpu.memory_space<vmem>>, vector<16x32xf32>
    %c0_98 = arith.constant 0 : index
    %c128 = arith.constant 128 : index
    %71 = vector.load %arg22[%c0_98, %c128] : memref<32x384xf32, #tpu.memory_space<vmem>>, vector<16x32xf32>
    tpu.vector_store %arg22[%c0_98, %c128], %70 {strides = array<i32>} : memref<32x384xf32, #tpu.memory_space<vmem>>, vector<16x32xf32>,
    %c55_99 = arith.constant 55 : index
    %c0_100 = arith.constant 0 : index
    %72 = vector.load %arg21[%c55_99, %c0_100] : memref<72x64xf32, #tpu.memory_space<vmem>>, vector<16x32xf32>
    %c16_101 = arith.constant 16 : index
    %c128_102 = arith.constant 128 : index
    %73 = vector.load %arg22[%c16_101, %c128_102] : memref<32x384xf32, #tpu.memory_space<vmem>>, vector<16x32xf32>
    tpu.vector_store %arg22[%c16_101, %c128_102], %72 {strides = array<i32>} : memref<32x384xf32, #tpu.memory_space<vmem>>, vector<16x32xf32>,
    %c20_103 = arith.constant 20 : index
    %c0_104 = arith.constant 0 : index
    %74 = vector.load %arg21[%c20_103, %c0_104] : memref<72x64xf32, #tpu.memory_space<vmem>>, vector<16x32xf32>
    %c0_105 = arith.constant 0 : index
    %c160 = arith.constant 160 : index
    %75 = vector.load %arg22[%c0_105, %c160] : memref<32x384xf32, #tpu.memory_space<vmem>>, vector<16x32xf32>
    tpu.vector_store %arg22[%c0_105, %c160], %74 {strides = array<i32>} : memref<32x384xf32, #tpu.memory_space<vmem>>, vector<16x32xf32>,
    %c56_106 = arith.constant 56 : index
    %c0_107 = arith.constant 0 : index
    %76 = vector.load %arg21[%c56_106, %c0_107] : memref<72x64xf32, #tpu.memory_space<vmem>>, vector<16x32xf32>
    %c16_108 = arith.constant 16 : index
    %c160_109 = arith.constant 160 : index
    %77 = vector.load %arg22[%c16_108, %c160_109] : memref<32x384xf32, #tpu.memory_space<vmem>>, vector<16x32xf32>
    tpu.vector_store %arg22[%c16_108, %c160_109], %76 {strides = array<i32>} : memref<32x384xf32, #tpu.memory_space<vmem>>, vector<16x32xf32>,
    %c0_110 = arith.constant 0 : index
    %c0_111 = arith.constant 0 : index
    %78 = vector.load %arg22[%c0_110, %c0_111] : memref<32x384xf32, #tpu.memory_space<vmem>>, vector<32x192xf32>
    %cst_112 = arith.constant dense<0.000000e+00> : vector<32x32xf32>
    %79 = tpu.matmul %78, %12, %cst_112 {dimension_numbers = #tpu.dot_dimension_numbers<[1], [0], [0], [1], [0, 0, 1, 1], [], []>} : vector<32x192xf32>, vector<192x32xf32>, vector<32x32xf32> -> vector<32x32xf32>
    %80 = vector.broadcast %13 : vector<1x32xf32> to vector<32x32xf32>
    %81 = arith.addf %79, %80 : vector<32x32xf32>
    %cst_113 = arith.constant 0.000000e+00 : f32
    %82 = vector.broadcast %cst_113 : f32 to vector<32x32xf32>
    %83 = arith.maximumf %81, %82 : vector<32x32xf32>
    %84 = arith.addf %83, %49 : vector<32x32xf32>
    %cst_114 = arith.constant 0.000000e+00 : f32
    %85 = vector.broadcast %cst_114 : f32 to vector<32x32xf32>
    %86 = arith.maximumf %84, %85 : vector<32x32xf32>
    %87 = vector.extract_strided_slice %86 {offsets = [0, 0], sizes = [16, 32], strides = [1, 1]} : vector<32x32xf32> to vector<16x32xf32>
    %c20_115 = arith.constant 20 : index
    %c0_116 = arith.constant 0 : index
    %88 = vector.load %arg20[%c20_115, %c0_116] : memref<72x64xf32, #tpu.memory_space<vmem>>, vector<16x32xf32>
    tpu.vector_store %arg20[%c20_115, %c0_116], %87 {strides = array<i32>} : memref<72x64xf32, #tpu.memory_space<vmem>>, vector<16x32xf32>,
    %89 = vector.extract_strided_slice %86 {offsets = [16, 0], sizes = [16, 32], strides = [1, 1]} : vector<32x32xf32> to vector<16x32xf32>
    %c56_117 = arith.constant 56 : index
    %c0_118 = arith.constant 0 : index
    %90 = vector.load %arg20[%c56_117, %c0_118] : memref<72x64xf32, #tpu.memory_space<vmem>>, vector<16x32xf32>
    tpu.vector_store %arg20[%c56_117, %c0_118], %89 {strides = array<i32>} : memref<72x64xf32, #tpu.memory_space<vmem>>, vector<16x32xf32>,
    %c0_119 = arith.constant 0 : index
    %c0_120 = arith.constant 0 : index
    %91 = vector.load %arg7[%c0_119, %c0_120] : memref<192x64xf32, #tpu.memory_space<vmem>>, vector<192x64xf32>
    %c0_121 = arith.constant 0 : index
    %c0_122 = arith.constant 0 : index
    %92 = vector.load %arg8[%c0_121, %c0_122] : memref<1x64xf32, #tpu.memory_space<vmem>>, vector<1x64xf32>
    %c0_123 = arith.constant 0 : index
    %c0_124 = arith.constant 0 : index
    %93 = vector.load %arg9[%c0_123, %c0_124] : memref<384x64xf32, #tpu.memory_space<vmem>>, vector<384x64xf32>
    %c0_125 = arith.constant 0 : index
    %c0_126 = arith.constant 0 : index
    %94 = vector.load %arg10[%c0_125, %c0_126] : memref<1x64xf32, #tpu.memory_space<vmem>>, vector<1x64xf32>
    %c10 = arith.constant 10 : index
    %c0_127 = arith.constant 0 : index
    %95 = vector.load %arg20[%c10, %c0_127] : memref<72x64xf32, #tpu.memory_space<vmem>>, vector<16x32xf32>
    %c0_128 = arith.constant 0 : index
    %c0_129 = arith.constant 0 : index
    %96 = vector.load %arg22[%c0_128, %c0_129] : memref<32x384xf32, #tpu.memory_space<vmem>>, vector<16x32xf32>
    tpu.vector_store %arg22[%c0_128, %c0_129], %95 {strides = array<i32>} : memref<32x384xf32, #tpu.memory_space<vmem>>, vector<16x32xf32>,
    %c46 = arith.constant 46 : index
    %c0_130 = arith.constant 0 : index
    %97 = vector.load %arg20[%c46, %c0_130] : memref<72x64xf32, #tpu.memory_space<vmem>>, vector<16x32xf32>
    %c16_131 = arith.constant 16 : index
    %c0_132 = arith.constant 0 : index
    %98 = vector.load %arg22[%c16_131, %c0_132] : memref<32x384xf32, #tpu.memory_space<vmem>>, vector<16x32xf32>
    tpu.vector_store %arg22[%c16_131, %c0_132], %97 {strides = array<i32>} : memref<32x384xf32, #tpu.memory_space<vmem>>, vector<16x32xf32>,
    %c12_133 = arith.constant 12 : index
    %c0_134 = arith.constant 0 : index
    %99 = vector.load %arg20[%c12_133, %c0_134] : memref<72x64xf32, #tpu.memory_space<vmem>>, vector<16x32xf32>
    %c0_135 = arith.constant 0 : index
    %c32_136 = arith.constant 32 : index
    %100 = vector.load %arg22[%c0_135, %c32_136] : memref<32x384xf32, #tpu.memory_space<vmem>>, vector<16x32xf32>
    tpu.vector_store %arg22[%c0_135, %c32_136], %99 {strides = array<i32>} : memref<32x384xf32, #tpu.memory_space<vmem>>, vector<16x32xf32>,
    %c48 = arith.constant 48 : index
    %c0_137 = arith.constant 0 : index
    %101 = vector.load %arg20[%c48, %c0_137] : memref<72x64xf32, #tpu.memory_space<vmem>>, vector<16x32xf32>
    %c16_138 = arith.constant 16 : index
    %c32_139 = arith.constant 32 : index
    %102 = vector.load %arg22[%c16_138, %c32_139] : memref<32x384xf32, #tpu.memory_space<vmem>>, vector<16x32xf32>
    tpu.vector_store %arg22[%c16_138, %c32_139], %101 {strides = array<i32>} : memref<32x384xf32, #tpu.memory_space<vmem>>, vector<16x32xf32>,
    %c14 = arith.constant 14 : index
    %c0_140 = arith.constant 0 : index
    %103 = vector.load %arg20[%c14, %c0_140] : memref<72x64xf32, #tpu.memory_space<vmem>>, vector<16x32xf32>
    %c0_141 = arith.constant 0 : index
    %c64_142 = arith.constant 64 : index
    %104 = vector.load %arg22[%c0_141, %c64_142] : memref<32x384xf32, #tpu.memory_space<vmem>>, vector<16x32xf32>
    tpu.vector_store %arg22[%c0_141, %c64_142], %103 {strides = array<i32>} : memref<32x384xf32, #tpu.memory_space<vmem>>, vector<16x32xf32>,
    %c50 = arith.constant 50 : index
    %c0_143 = arith.constant 0 : index
    %105 = vector.load %arg20[%c50, %c0_143] : memref<72x64xf32, #tpu.memory_space<vmem>>, vector<16x32xf32>
    %c16_144 = arith.constant 16 : index
    %c64_145 = arith.constant 64 : index
    %106 = vector.load %arg22[%c16_144, %c64_145] : memref<32x384xf32, #tpu.memory_space<vmem>>, vector<16x32xf32>
    tpu.vector_store %arg22[%c16_144, %c64_145], %105 {strides = array<i32>} : memref<32x384xf32, #tpu.memory_space<vmem>>, vector<16x32xf32>,
    %c16_146 = arith.constant 16 : index
    %c0_147 = arith.constant 0 : index
    %107 = vector.load %arg20[%c16_146, %c0_147] : memref<72x64xf32, #tpu.memory_space<vmem>>, vector<16x32xf32>
    %c0_148 = arith.constant 0 : index
    %c96_149 = arith.constant 96 : index
    %108 = vector.load %arg22[%c0_148, %c96_149] : memref<32x384xf32, #tpu.memory_space<vmem>>, vector<16x32xf32>
    tpu.vector_store %arg22[%c0_148, %c96_149], %107 {strides = array<i32>} : memref<32x384xf32, #tpu.memory_space<vmem>>, vector<16x32xf32>,
    %c52_150 = arith.constant 52 : index
    %c0_151 = arith.constant 0 : index
    %109 = vector.load %arg20[%c52_150, %c0_151] : memref<72x64xf32, #tpu.memory_space<vmem>>, vector<16x32xf32>
    %c16_152 = arith.constant 16 : index
    %c96_153 = arith.constant 96 : index
    %110 = vector.load %arg22[%c16_152, %c96_153] : memref<32x384xf32, #tpu.memory_space<vmem>>, vector<16x32xf32>
    tpu.vector_store %arg22[%c16_152, %c96_153], %109 {strides = array<i32>} : memref<32x384xf32, #tpu.memory_space<vmem>>, vector<16x32xf32>,
    %c18_154 = arith.constant 18 : index
    %c0_155 = arith.constant 0 : index
    %111 = vector.load %arg20[%c18_154, %c0_155] : memref<72x64xf32, #tpu.memory_space<vmem>>, vector<16x32xf32>
    %c0_156 = arith.constant 0 : index
    %c128_157 = arith.constant 128 : index
    %112 = vector.load %arg22[%c0_156, %c128_157] : memref<32x384xf32, #tpu.memory_space<vmem>>, vector<16x32xf32>
    tpu.vector_store %arg22[%c0_156, %c128_157], %111 {strides = array<i32>} : memref<32x384xf32, #tpu.memory_space<vmem>>, vector<16x32xf32>,
    %c54_158 = arith.constant 54 : index
    %c0_159 = arith.constant 0 : index
    %113 = vector.load %arg20[%c54_158, %c0_159] : memref<72x64xf32, #tpu.memory_space<vmem>>, vector<16x32xf32>
    %c16_160 = arith.constant 16 : index
    %c128_161 = arith.constant 128 : index
    %114 = vector.load %arg22[%c16_160, %c128_161] : memref<32x384xf32, #tpu.memory_space<vmem>>, vector<16x32xf32>
    tpu.vector_store %arg22[%c16_160, %c128_161], %113 {strides = array<i32>} : memref<32x384xf32, #tpu.memory_space<vmem>>, vector<16x32xf32>,
    %c20_162 = arith.constant 20 : index
    %c0_163 = arith.constant 0 : index
    %115 = vector.load %arg20[%c20_162, %c0_163] : memref<72x64xf32, #tpu.memory_space<vmem>>, vector<16x32xf32>
    %c0_164 = arith.constant 0 : index
    %c160_165 = arith.constant 160 : index
    %116 = vector.load %arg22[%c0_164, %c160_165] : memref<32x384xf32, #tpu.memory_space<vmem>>, vector<16x32xf32>
    tpu.vector_store %arg22[%c0_164, %c160_165], %115 {strides = array<i32>} : memref<32x384xf32, #tpu.memory_space<vmem>>, vector<16x32xf32>,
    %c56_166 = arith.constant 56 : index
    %c0_167 = arith.constant 0 : index
    %117 = vector.load %arg20[%c56_166, %c0_167] : memref<72x64xf32, #tpu.memory_space<vmem>>, vector<16x32xf32>
    %c16_168 = arith.constant 16 : index
    %c160_169 = arith.constant 160 : index
    %118 = vector.load %arg22[%c16_168, %c160_169] : memref<32x384xf32, #tpu.memory_space<vmem>>, vector<16x32xf32>
    tpu.vector_store %arg22[%c16_168, %c160_169], %117 {strides = array<i32>} : memref<32x384xf32, #tpu.memory_space<vmem>>, vector<16x32xf32>,
    %c0_170 = arith.constant 0 : index
    %c0_171 = arith.constant 0 : index
    %119 = vector.load %arg22[%c0_170, %c0_171] : memref<32x384xf32, #tpu.memory_space<vmem>>, vector<32x192xf32>
    %cst_172 = arith.constant dense<0.000000e+00> : vector<32x64xf32>
    %120 = tpu.matmul %119, %91, %cst_172 {dimension_numbers = #tpu.dot_dimension_numbers<[1], [0], [0], [1], [0, 0, 1, 1], [], []>} : vector<32x192xf32>, vector<192x64xf32>, vector<32x64xf32> -> vector<32x64xf32>
    %121 = vector.broadcast %92 : vector<1x64xf32> to vector<32x64xf32>
    %122 = arith.addf %120, %121 : vector<32x64xf32>
    %cst_173 = arith.constant 0.000000e+00 : f32
    %123 = vector.broadcast %cst_173 : f32 to vector<32x64xf32>
    %124 = arith.maximumf %122, %123 : vector<32x64xf32>
    %125 = vector.extract_strided_slice %119 {offsets = [0, 160], sizes = [32, 32], strides = [1, 1]} : vector<32x192xf32> to vector<32x32xf32>
    %c0_174 = arith.constant 0 : index
    %c0_175 = arith.constant 0 : index
    %126 = vector.load %arg11[%c0_174, %c0_175] : memref<32x64xf32, #tpu.memory_space<vmem>>, vector<32x64xf32>
    %c0_176 = arith.constant 0 : index
    %c0_177 = arith.constant 0 : index
    %127 = vector.load %arg12[%c0_176, %c0_177] : memref<1x64xf32, #tpu.memory_space<vmem>>, vector<1x64xf32>
    %cst_178 = arith.constant dense<0.000000e+00> : vector<32x64xf32>
    %128 = tpu.matmul %125, %126, %cst_178 {dimension_numbers = #tpu.dot_dimension_numbers<[1], [0], [0], [1], [0, 0, 1, 1], [], []>} : vector<32x32xf32>, vector<32x64xf32>, vector<32x64xf32> -> vector<32x64xf32>
    %129 = vector.broadcast %127 : vector<1x64xf32> to vector<32x64xf32>
    %130 = arith.addf %128, %129 : vector<32x64xf32>
    %131 = vector.extract_strided_slice %124 {offsets = [0, 0], sizes = [16, 64], strides = [1, 1]} : vector<32x64xf32> to vector<16x64xf32>
    %c20_179 = arith.constant 20 : index
    %c0_180 = arith.constant 0 : index
    %132 = vector.load %arg21[%c20_179, %c0_180] : memref<72x64xf32, #tpu.memory_space<vmem>>, vector<16x64xf32>
    tpu.vector_store %arg21[%c20_179, %c0_180], %131 {strides = array<i32>} : memref<72x64xf32, #tpu.memory_space<vmem>>, vector<16x64xf32>,
    %133 = vector.extract_strided_slice %124 {offsets = [16, 0], sizes = [16, 64], strides = [1, 1]} : vector<32x64xf32> to vector<16x64xf32>
    %c56_181 = arith.constant 56 : index
    %c0_182 = arith.constant 0 : index
    %134 = vector.load %arg21[%c56_181, %c0_182] : memref<72x64xf32, #tpu.memory_space<vmem>>, vector<16x64xf32>
    tpu.vector_store %arg21[%c56_181, %c0_182], %133 {strides = array<i32>} : memref<72x64xf32, #tpu.memory_space<vmem>>, vector<16x64xf32>,
    %c10_183 = arith.constant 10 : index
    %c0_184 = arith.constant 0 : index
    %135 = vector.load %arg21[%c10_183, %c0_184] : memref<72x64xf32, #tpu.memory_space<vmem>>, vector<16x64xf32>
    %c0_185 = arith.constant 0 : index
    %c0_186 = arith.constant 0 : index
    %136 = vector.load %arg22[%c0_185, %c0_186] : memref<32x384xf32, #tpu.memory_space<vmem>>, vector<16x64xf32>
    tpu.vector_store %arg22[%c0_185, %c0_186], %135 {strides = array<i32>} : memref<32x384xf32, #tpu.memory_space<vmem>>, vector<16x64xf32>,
    %c46_187 = arith.constant 46 : index
    %c0_188 = arith.constant 0 : index
    %137 = vector.load %arg21[%c46_187, %c0_188] : memref<72x64xf32, #tpu.memory_space<vmem>>, vector<16x64xf32>
    %c16_189 = arith.constant 16 : index
    %c0_190 = arith.constant 0 : index
    %138 = vector.load %arg22[%c16_189, %c0_190] : memref<32x384xf32, #tpu.memory_space<vmem>>, vector<16x64xf32>
    tpu.vector_store %arg22[%c16_189, %c0_190], %137 {strides = array<i32>} : memref<32x384xf32, #tpu.memory_space<vmem>>, vector<16x64xf32>,
    %c12_191 = arith.constant 12 : index
    %c0_192 = arith.constant 0 : index
    %139 = vector.load %arg21[%c12_191, %c0_192] : memref<72x64xf32, #tpu.memory_space<vmem>>, vector<16x64xf32>
    %c0_193 = arith.constant 0 : index
    %c64_194 = arith.constant 64 : index
    %140 = vector.load %arg22[%c0_193, %c64_194] : memref<32x384xf32, #tpu.memory_space<vmem>>, vector<16x64xf32>
    tpu.vector_store %arg22[%c0_193, %c64_194], %139 {strides = array<i32>} : memref<32x384xf32, #tpu.memory_space<vmem>>, vector<16x64xf32>,
    %c48_195 = arith.constant 48 : index
    %c0_196 = arith.constant 0 : index
    %141 = vector.load %arg21[%c48_195, %c0_196] : memref<72x64xf32, #tpu.memory_space<vmem>>, vector<16x64xf32>
    %c16_197 = arith.constant 16 : index
    %c64_198 = arith.constant 64 : index
    %142 = vector.load %arg22[%c16_197, %c64_198] : memref<32x384xf32, #tpu.memory_space<vmem>>, vector<16x64xf32>
    tpu.vector_store %arg22[%c16_197, %c64_198], %141 {strides = array<i32>} : memref<32x384xf32, #tpu.memory_space<vmem>>, vector<16x64xf32>,
    %c14_199 = arith.constant 14 : index
    %c0_200 = arith.constant 0 : index
    %143 = vector.load %arg21[%c14_199, %c0_200] : memref<72x64xf32, #tpu.memory_space<vmem>>, vector<16x64xf32>
    %c0_201 = arith.constant 0 : index
    %c128_202 = arith.constant 128 : index
    %144 = vector.load %arg22[%c0_201, %c128_202] : memref<32x384xf32, #tpu.memory_space<vmem>>, vector<16x64xf32>
    tpu.vector_store %arg22[%c0_201, %c128_202], %143 {strides = array<i32>} : memref<32x384xf32, #tpu.memory_space<vmem>>, vector<16x64xf32>,
    %c50_203 = arith.constant 50 : index
    %c0_204 = arith.constant 0 : index
    %145 = vector.load %arg21[%c50_203, %c0_204] : memref<72x64xf32, #tpu.memory_space<vmem>>, vector<16x64xf32>
    %c16_205 = arith.constant 16 : index
    %c128_206 = arith.constant 128 : index
    %146 = vector.load %arg22[%c16_205, %c128_206] : memref<32x384xf32, #tpu.memory_space<vmem>>, vector<16x64xf32>
    tpu.vector_store %arg22[%c16_205, %c128_206], %145 {strides = array<i32>} : memref<32x384xf32, #tpu.memory_space<vmem>>, vector<16x64xf32>,
    %c16_207 = arith.constant 16 : index
    %c0_208 = arith.constant 0 : index
    %147 = vector.load %arg21[%c16_207, %c0_208] : memref<72x64xf32, #tpu.memory_space<vmem>>, vector<16x64xf32>
    %c0_209 = arith.constant 0 : index
    %c192 = arith.constant 192 : index
    %148 = vector.load %arg22[%c0_209, %c192] : memref<32x384xf32, #tpu.memory_space<vmem>>, vector<16x64xf32>
    tpu.vector_store %arg22[%c0_209, %c192], %147 {strides = array<i32>} : memref<32x384xf32, #tpu.memory_space<vmem>>, vector<16x64xf32>,
    %c52_210 = arith.constant 52 : index
    %c0_211 = arith.constant 0 : index
    %149 = vector.load %arg21[%c52_210, %c0_211] : memref<72x64xf32, #tpu.memory_space<vmem>>, vector<16x64xf32>
    %c16_212 = arith.constant 16 : index
    %c192_213 = arith.constant 192 : index
    %150 = vector.load %arg22[%c16_212, %c192_213] : memref<32x384xf32, #tpu.memory_space<vmem>>, vector<16x64xf32>
    tpu.vector_store %arg22[%c16_212, %c192_213], %149 {strides = array<i32>} : memref<32x384xf32, #tpu.memory_space<vmem>>, vector<16x64xf32>,
    %c18_214 = arith.constant 18 : index
    %c0_215 = arith.constant 0 : index
    %151 = vector.load %arg21[%c18_214, %c0_215] : memref<72x64xf32, #tpu.memory_space<vmem>>, vector<16x64xf32>
    %c0_216 = arith.constant 0 : index
    %c256 = arith.constant 256 : index
    %152 = vector.load %arg22[%c0_216, %c256] : memref<32x384xf32, #tpu.memory_space<vmem>>, vector<16x64xf32>
    tpu.vector_store %arg22[%c0_216, %c256], %151 {strides = array<i32>} : memref<32x384xf32, #tpu.memory_space<vmem>>, vector<16x64xf32>,
    %c54_217 = arith.constant 54 : index
    %c0_218 = arith.constant 0 : index
    %153 = vector.load %arg21[%c54_217, %c0_218] : memref<72x64xf32, #tpu.memory_space<vmem>>, vector<16x64xf32>
    %c16_219 = arith.constant 16 : index
    %c256_220 = arith.constant 256 : index
    %154 = vector.load %arg22[%c16_219, %c256_220] : memref<32x384xf32, #tpu.memory_space<vmem>>, vector<16x64xf32>
    tpu.vector_store %arg22[%c16_219, %c256_220], %153 {strides = array<i32>} : memref<32x384xf32, #tpu.memory_space<vmem>>, vector<16x64xf32>,
    %c20_221 = arith.constant 20 : index
    %c0_222 = arith.constant 0 : index
    %155 = vector.load %arg21[%c20_221, %c0_222] : memref<72x64xf32, #tpu.memory_space<vmem>>, vector<16x64xf32>
    %c0_223 = arith.constant 0 : index
    %c320 = arith.constant 320 : index
    %156 = vector.load %arg22[%c0_223, %c320] : memref<32x384xf32, #tpu.memory_space<vmem>>, vector<16x64xf32>
    tpu.vector_store %arg22[%c0_223, %c320], %155 {strides = array<i32>} : memref<32x384xf32, #tpu.memory_space<vmem>>, vector<16x64xf32>,
    %c56_224 = arith.constant 56 : index
    %c0_225 = arith.constant 0 : index
    %157 = vector.load %arg21[%c56_224, %c0_225] : memref<72x64xf32, #tpu.memory_space<vmem>>, vector<16x64xf32>
    %c16_226 = arith.constant 16 : index
    %c320_227 = arith.constant 320 : index
    %158 = vector.load %arg22[%c16_226, %c320_227] : memref<32x384xf32, #tpu.memory_space<vmem>>, vector<16x64xf32>
    tpu.vector_store %arg22[%c16_226, %c320_227], %157 {strides = array<i32>} : memref<32x384xf32, #tpu.memory_space<vmem>>, vector<16x64xf32>,
    %c0_228 = arith.constant 0 : index
    %c0_229 = arith.constant 0 : index
    %159 = vector.load %arg22[%c0_228, %c0_229] : memref<32x384xf32, #tpu.memory_space<vmem>>, vector<32x384xf32>
    %cst_230 = arith.constant dense<0.000000e+00> : vector<32x64xf32>
    %160 = tpu.matmul %159, %93, %cst_230 {dimension_numbers = #tpu.dot_dimension_numbers<[1], [0], [0], [1], [0, 0, 1, 1], [], []>} : vector<32x384xf32>, vector<384x64xf32>, vector<32x64xf32> -> vector<32x64xf32>
    %161 = vector.broadcast %94 : vector<1x64xf32> to vector<32x64xf32>
    %162 = arith.addf %160, %161 : vector<32x64xf32>
    %cst_231 = arith.constant 0.000000e+00 : f32
    %163 = vector.broadcast %cst_231 : f32 to vector<32x64xf32>
    %164 = arith.maximumf %162, %163 : vector<32x64xf32>
    %165 = arith.addf %164, %130 : vector<32x64xf32>
    %cst_232 = arith.constant 0.000000e+00 : f32
    %166 = vector.broadcast %cst_232 : f32 to vector<32x64xf32>
    %167 = arith.maximumf %165, %166 : vector<32x64xf32>
    %168 = vector.extract_strided_slice %167 {offsets = [0, 0], sizes = [16, 64], strides = [1, 1]} : vector<32x64xf32> to vector<16x64xf32>
    %c20_233 = arith.constant 20 : index
    %c0_234 = arith.constant 0 : index
    %169 = vector.load %arg20[%c20_233, %c0_234] : memref<72x64xf32, #tpu.memory_space<vmem>>, vector<16x64xf32>
    tpu.vector_store %arg20[%c20_233, %c0_234], %168 {strides = array<i32>} : memref<72x64xf32, #tpu.memory_space<vmem>>, vector<16x64xf32>,
    %170 = vector.extract_strided_slice %167 {offsets = [16, 0], sizes = [16, 64], strides = [1, 1]} : vector<32x64xf32> to vector<16x64xf32>
    %c56_235 = arith.constant 56 : index
    %c0_236 = arith.constant 0 : index
    %171 = vector.load %arg20[%c56_235, %c0_236] : memref<72x64xf32, #tpu.memory_space<vmem>>, vector<16x64xf32>
    tpu.vector_store %arg20[%c56_235, %c0_236], %170 {strides = array<i32>} : memref<72x64xf32, #tpu.memory_space<vmem>>, vector<16x64xf32>,
    %c0_237 = arith.constant 0 : index
    %c0_238 = arith.constant 0 : index
    %172 = vector.load %arg13[%c0_237, %c0_238] : memref<384x64xf32, #tpu.memory_space<vmem>>, vector<384x64xf32>
    %c0_239 = arith.constant 0 : index
    %c0_240 = arith.constant 0 : index
    %173 = vector.load %arg14[%c0_239, %c0_240] : memref<1x64xf32, #tpu.memory_space<vmem>>, vector<1x64xf32>
    %c0_241 = arith.constant 0 : index
    %c0_242 = arith.constant 0 : index
    %174 = vector.load %arg15[%c0_241, %c0_242] : memref<384x64xf32, #tpu.memory_space<vmem>>, vector<384x64xf32>
    %c0_243 = arith.constant 0 : index
    %c0_244 = arith.constant 0 : index
    %175 = vector.load %arg16[%c0_243, %c0_244] : memref<1x64xf32, #tpu.memory_space<vmem>>, vector<1x64xf32>
    %c0_245 = arith.constant 0 : index
    %c0_246 = arith.constant 0 : index
    %176 = vector.load %arg20[%c0_245, %c0_246] : memref<72x64xf32, #tpu.memory_space<vmem>>, vector<16x64xf32>
    %c0_247 = arith.constant 0 : index
    %c0_248 = arith.constant 0 : index
    %177 = vector.load %arg22[%c0_247, %c0_248] : memref<32x384xf32, #tpu.memory_space<vmem>>, vector<16x64xf32>
    tpu.vector_store %arg22[%c0_247, %c0_248], %176 {strides = array<i32>} : memref<32x384xf32, #tpu.memory_space<vmem>>, vector<16x64xf32>,
    %c36 = arith.constant 36 : index
    %c0_249 = arith.constant 0 : index
    %178 = vector.load %arg20[%c36, %c0_249] : memref<72x64xf32, #tpu.memory_space<vmem>>, vector<16x64xf32>
    %c16_250 = arith.constant 16 : index
    %c0_251 = arith.constant 0 : index
    %179 = vector.load %arg22[%c16_250, %c0_251] : memref<32x384xf32, #tpu.memory_space<vmem>>, vector<16x64xf32>
    tpu.vector_store %arg22[%c16_250, %c0_251], %178 {strides = array<i32>} : memref<32x384xf32, #tpu.memory_space<vmem>>, vector<16x64xf32>,
    %c4_252 = arith.constant 4 : index
    %c0_253 = arith.constant 0 : index
    %180 = vector.load %arg20[%c4_252, %c0_253] : memref<72x64xf32, #tpu.memory_space<vmem>>, vector<16x64xf32>
    %c0_254 = arith.constant 0 : index
    %c64_255 = arith.constant 64 : index
    %181 = vector.load %arg22[%c0_254, %c64_255] : memref<32x384xf32, #tpu.memory_space<vmem>>, vector<16x64xf32>
    tpu.vector_store %arg22[%c0_254, %c64_255], %180 {strides = array<i32>} : memref<32x384xf32, #tpu.memory_space<vmem>>, vector<16x64xf32>,
    %c40 = arith.constant 40 : index
    %c0_256 = arith.constant 0 : index
    %182 = vector.load %arg20[%c40, %c0_256] : memref<72x64xf32, #tpu.memory_space<vmem>>, vector<16x64xf32>
    %c16_257 = arith.constant 16 : index
    %c64_258 = arith.constant 64 : index
    %183 = vector.load %arg22[%c16_257, %c64_258] : memref<32x384xf32, #tpu.memory_space<vmem>>, vector<16x64xf32>
    tpu.vector_store %arg22[%c16_257, %c64_258], %182 {strides = array<i32>} : memref<32x384xf32, #tpu.memory_space<vmem>>, vector<16x64xf32>,
    %c8_259 = arith.constant 8 : index
    %c0_260 = arith.constant 0 : index
    %184 = vector.load %arg20[%c8_259, %c0_260] : memref<72x64xf32, #tpu.memory_space<vmem>>, vector<16x64xf32>
    %c0_261 = arith.constant 0 : index
    %c128_262 = arith.constant 128 : index
    %185 = vector.load %arg22[%c0_261, %c128_262] : memref<32x384xf32, #tpu.memory_space<vmem>>, vector<16x64xf32>
    tpu.vector_store %arg22[%c0_261, %c128_262], %184 {strides = array<i32>} : memref<32x384xf32, #tpu.memory_space<vmem>>, vector<16x64xf32>,
    %c44 = arith.constant 44 : index
    %c0_263 = arith.constant 0 : index
    %186 = vector.load %arg20[%c44, %c0_263] : memref<72x64xf32, #tpu.memory_space<vmem>>, vector<16x64xf32>
    %c16_264 = arith.constant 16 : index
    %c128_265 = arith.constant 128 : index
    %187 = vector.load %arg22[%c16_264, %c128_265] : memref<32x384xf32, #tpu.memory_space<vmem>>, vector<16x64xf32>
    tpu.vector_store %arg22[%c16_264, %c128_265], %186 {strides = array<i32>} : memref<32x384xf32, #tpu.memory_space<vmem>>, vector<16x64xf32>,
    %c12_266 = arith.constant 12 : index
    %c0_267 = arith.constant 0 : index
    %188 = vector.load %arg20[%c12_266, %c0_267] : memref<72x64xf32, #tpu.memory_space<vmem>>, vector<16x64xf32>
    %c0_268 = arith.constant 0 : index
    %c192_269 = arith.constant 192 : index
    %189 = vector.load %arg22[%c0_268, %c192_269] : memref<32x384xf32, #tpu.memory_space<vmem>>, vector<16x64xf32>
    tpu.vector_store %arg22[%c0_268, %c192_269], %188 {strides = array<i32>} : memref<32x384xf32, #tpu.memory_space<vmem>>, vector<16x64xf32>,
    %c48_270 = arith.constant 48 : index
    %c0_271 = arith.constant 0 : index
    %190 = vector.load %arg20[%c48_270, %c0_271] : memref<72x64xf32, #tpu.memory_space<vmem>>, vector<16x64xf32>
    %c16_272 = arith.constant 16 : index
    %c192_273 = arith.constant 192 : index
    %191 = vector.load %arg22[%c16_272, %c192_273] : memref<32x384xf32, #tpu.memory_space<vmem>>, vector<16x64xf32>
    tpu.vector_store %arg22[%c16_272, %c192_273], %190 {strides = array<i32>} : memref<32x384xf32, #tpu.memory_space<vmem>>, vector<16x64xf32>,
    %c16_274 = arith.constant 16 : index
    %c0_275 = arith.constant 0 : index
    %192 = vector.load %arg20[%c16_274, %c0_275] : memref<72x64xf32, #tpu.memory_space<vmem>>, vector<16x64xf32>
    %c0_276 = arith.constant 0 : index
    %c256_277 = arith.constant 256 : index
    %193 = vector.load %arg22[%c0_276, %c256_277] : memref<32x384xf32, #tpu.memory_space<vmem>>, vector<16x64xf32>
    tpu.vector_store %arg22[%c0_276, %c256_277], %192 {strides = array<i32>} : memref<32x384xf32, #tpu.memory_space<vmem>>, vector<16x64xf32>,
    %c52_278 = arith.constant 52 : index
    %c0_279 = arith.constant 0 : index
    %194 = vector.load %arg20[%c52_278, %c0_279] : memref<72x64xf32, #tpu.memory_space<vmem>>, vector<16x64xf32>
    %c16_280 = arith.constant 16 : index
    %c256_281 = arith.constant 256 : index
    %195 = vector.load %arg22[%c16_280, %c256_281] : memref<32x384xf32, #tpu.memory_space<vmem>>, vector<16x64xf32>
    tpu.vector_store %arg22[%c16_280, %c256_281], %194 {strides = array<i32>} : memref<32x384xf32, #tpu.memory_space<vmem>>, vector<16x64xf32>,
    %c20_282 = arith.constant 20 : index
    %c0_283 = arith.constant 0 : index
    %196 = vector.load %arg20[%c20_282, %c0_283] : memref<72x64xf32, #tpu.memory_space<vmem>>, vector<16x64xf32>
    %c0_284 = arith.constant 0 : index
    %c320_285 = arith.constant 320 : index
    %197 = vector.load %arg22[%c0_284, %c320_285] : memref<32x384xf32, #tpu.memory_space<vmem>>, vector<16x64xf32>
    tpu.vector_store %arg22[%c0_284, %c320_285], %196 {strides = array<i32>} : memref<32x384xf32, #tpu.memory_space<vmem>>, vector<16x64xf32>,
    %c56_286 = arith.constant 56 : index
    %c0_287 = arith.constant 0 : index
    %198 = vector.load %arg20[%c56_286, %c0_287] : memref<72x64xf32, #tpu.memory_space<vmem>>, vector<16x64xf32>
    %c16_288 = arith.constant 16 : index
    %c320_289 = arith.constant 320 : index
    %199 = vector.load %arg22[%c16_288, %c320_289] : memref<32x384xf32, #tpu.memory_space<vmem>>, vector<16x64xf32>
    tpu.vector_store %arg22[%c16_288, %c320_289], %198 {strides = array<i32>} : memref<32x384xf32, #tpu.memory_space<vmem>>, vector<16x64xf32>,
    %c0_290 = arith.constant 0 : index
    %c0_291 = arith.constant 0 : index
    %200 = vector.load %arg22[%c0_290, %c0_291] : memref<32x384xf32, #tpu.memory_space<vmem>>, vector<32x384xf32>
    %cst_292 = arith.constant dense<0.000000e+00> : vector<32x64xf32>
    %201 = tpu.matmul %200, %172, %cst_292 {dimension_numbers = #tpu.dot_dimension_numbers<[1], [0], [0], [1], [0, 0, 1, 1], [], []>} : vector<32x384xf32>, vector<384x64xf32>, vector<32x64xf32> -> vector<32x64xf32>
    %202 = vector.broadcast %173 : vector<1x64xf32> to vector<32x64xf32>
    %203 = arith.addf %201, %202 : vector<32x64xf32>
    %cst_293 = arith.constant 0.000000e+00 : f32
    %204 = vector.broadcast %cst_293 : f32 to vector<32x64xf32>
    %205 = arith.maximumf %203, %204 : vector<32x64xf32>
    %206 = vector.extract_strided_slice %200 {offsets = [0, 320], sizes = [32, 64], strides = [1, 1]} : vector<32x384xf32> to vector<32x64xf32>
    %207 = vector.extract_strided_slice %205 {offsets = [0, 0], sizes = [16, 64], strides = [1, 1]} : vector<32x64xf32> to vector<16x64xf32>
    %c20_294 = arith.constant 20 : index
    %c0_295 = arith.constant 0 : index
    %208 = vector.load %arg21[%c20_294, %c0_295] : memref<72x64xf32, #tpu.memory_space<vmem>>, vector<16x64xf32>
    tpu.vector_store %arg21[%c20_294, %c0_295], %207 {strides = array<i32>} : memref<72x64xf32, #tpu.memory_space<vmem>>, vector<16x64xf32>,
    %209 = vector.extract_strided_slice %205 {offsets = [16, 0], sizes = [16, 64], strides = [1, 1]} : vector<32x64xf32> to vector<16x64xf32>
    %c56_296 = arith.constant 56 : index
    %c0_297 = arith.constant 0 : index
    %210 = vector.load %arg21[%c56_296, %c0_297] : memref<72x64xf32, #tpu.memory_space<vmem>>, vector<16x64xf32>
    tpu.vector_store %arg21[%c56_296, %c0_297], %209 {strides = array<i32>} : memref<72x64xf32, #tpu.memory_space<vmem>>, vector<16x64xf32>,
    %c0_298 = arith.constant 0 : index
    %c0_299 = arith.constant 0 : index
    %211 = vector.load %arg21[%c0_298, %c0_299] : memref<72x64xf32, #tpu.memory_space<vmem>>, vector<16x64xf32>
    %c0_300 = arith.constant 0 : index
    %c0_301 = arith.constant 0 : index
    %212 = vector.load %arg22[%c0_300, %c0_301] : memref<32x384xf32, #tpu.memory_space<vmem>>, vector<16x64xf32>
    tpu.vector_store %arg22[%c0_300, %c0_301], %211 {strides = array<i32>} : memref<32x384xf32, #tpu.memory_space<vmem>>, vector<16x64xf32>,
    %c36_302 = arith.constant 36 : index
    %c0_303 = arith.constant 0 : index
    %213 = vector.load %arg21[%c36_302, %c0_303] : memref<72x64xf32, #tpu.memory_space<vmem>>, vector<16x64xf32>
    %c16_304 = arith.constant 16 : index
    %c0_305 = arith.constant 0 : index
    %214 = vector.load %arg22[%c16_304, %c0_305] : memref<32x384xf32, #tpu.memory_space<vmem>>, vector<16x64xf32>
    tpu.vector_store %arg22[%c16_304, %c0_305], %213 {strides = array<i32>} : memref<32x384xf32, #tpu.memory_space<vmem>>, vector<16x64xf32>,
    %c4_306 = arith.constant 4 : index
    %c0_307 = arith.constant 0 : index
    %215 = vector.load %arg21[%c4_306, %c0_307] : memref<72x64xf32, #tpu.memory_space<vmem>>, vector<16x64xf32>
    %c0_308 = arith.constant 0 : index
    %c64_309 = arith.constant 64 : index
    %216 = vector.load %arg22[%c0_308, %c64_309] : memref<32x384xf32, #tpu.memory_space<vmem>>, vector<16x64xf32>
    tpu.vector_store %arg22[%c0_308, %c64_309], %215 {strides = array<i32>} : memref<32x384xf32, #tpu.memory_space<vmem>>, vector<16x64xf32>,
    %c40_310 = arith.constant 40 : index
    %c0_311 = arith.constant 0 : index
    %217 = vector.load %arg21[%c40_310, %c0_311] : memref<72x64xf32, #tpu.memory_space<vmem>>, vector<16x64xf32>
    %c16_312 = arith.constant 16 : index
    %c64_313 = arith.constant 64 : index
    %218 = vector.load %arg22[%c16_312, %c64_313] : memref<32x384xf32, #tpu.memory_space<vmem>>, vector<16x64xf32>
    tpu.vector_store %arg22[%c16_312, %c64_313], %217 {strides = array<i32>} : memref<32x384xf32, #tpu.memory_space<vmem>>, vector<16x64xf32>,
    %c8_314 = arith.constant 8 : index
    %c0_315 = arith.constant 0 : index
    %219 = vector.load %arg21[%c8_314, %c0_315] : memref<72x64xf32, #tpu.memory_space<vmem>>, vector<16x64xf32>
    %c0_316 = arith.constant 0 : index
    %c128_317 = arith.constant 128 : index
    %220 = vector.load %arg22[%c0_316, %c128_317] : memref<32x384xf32, #tpu.memory_space<vmem>>, vector<16x64xf32>
    tpu.vector_store %arg22[%c0_316, %c128_317], %219 {strides = array<i32>} : memref<32x384xf32, #tpu.memory_space<vmem>>, vector<16x64xf32>,
    %c44_318 = arith.constant 44 : index
    %c0_319 = arith.constant 0 : index
    %221 = vector.load %arg21[%c44_318, %c0_319] : memref<72x64xf32, #tpu.memory_space<vmem>>, vector<16x64xf32>
    %c16_320 = arith.constant 16 : index
    %c128_321 = arith.constant 128 : index
    %222 = vector.load %arg22[%c16_320, %c128_321] : memref<32x384xf32, #tpu.memory_space<vmem>>, vector<16x64xf32>
    tpu.vector_store %arg22[%c16_320, %c128_321], %221 {strides = array<i32>} : memref<32x384xf32, #tpu.memory_space<vmem>>, vector<16x64xf32>,
    %c12_322 = arith.constant 12 : index
    %c0_323 = arith.constant 0 : index
    %223 = vector.load %arg21[%c12_322, %c0_323] : memref<72x64xf32, #tpu.memory_space<vmem>>, vector<16x64xf32>
    %c0_324 = arith.constant 0 : index
    %c192_325 = arith.constant 192 : index
    %224 = vector.load %arg22[%c0_324, %c192_325] : memref<32x384xf32, #tpu.memory_space<vmem>>, vector<16x64xf32>
    tpu.vector_store %arg22[%c0_324, %c192_325], %223 {strides = array<i32>} : memref<32x384xf32, #tpu.memory_space<vmem>>, vector<16x64xf32>,
    %c48_326 = arith.constant 48 : index
    %c0_327 = arith.constant 0 : index
    %225 = vector.load %arg21[%c48_326, %c0_327] : memref<72x64xf32, #tpu.memory_space<vmem>>, vector<16x64xf32>
    %c16_328 = arith.constant 16 : index
    %c192_329 = arith.constant 192 : index
    %226 = vector.load %arg22[%c16_328, %c192_329] : memref<32x384xf32, #tpu.memory_space<vmem>>, vector<16x64xf32>
    tpu.vector_store %arg22[%c16_328, %c192_329], %225 {strides = array<i32>} : memref<32x384xf32, #tpu.memory_space<vmem>>, vector<16x64xf32>,
    %c16_330 = arith.constant 16 : index
    %c0_331 = arith.constant 0 : index
    %227 = vector.load %arg21[%c16_330, %c0_331] : memref<72x64xf32, #tpu.memory_space<vmem>>, vector<16x64xf32>
    %c0_332 = arith.constant 0 : index
    %c256_333 = arith.constant 256 : index
    %228 = vector.load %arg22[%c0_332, %c256_333] : memref<32x384xf32, #tpu.memory_space<vmem>>, vector<16x64xf32>
    tpu.vector_store %arg22[%c0_332, %c256_333], %227 {strides = array<i32>} : memref<32x384xf32, #tpu.memory_space<vmem>>, vector<16x64xf32>,
    %c52_334 = arith.constant 52 : index
    %c0_335 = arith.constant 0 : index
    %229 = vector.load %arg21[%c52_334, %c0_335] : memref<72x64xf32, #tpu.memory_space<vmem>>, vector<16x64xf32>
    %c16_336 = arith.constant 16 : index
    %c256_337 = arith.constant 256 : index
    %230 = vector.load %arg22[%c16_336, %c256_337] : memref<32x384xf32, #tpu.memory_space<vmem>>, vector<16x64xf32>
    tpu.vector_store %arg22[%c16_336, %c256_337], %229 {strides = array<i32>} : memref<32x384xf32, #tpu.memory_space<vmem>>, vector<16x64xf32>,
    %c20_338 = arith.constant 20 : index
    %c0_339 = arith.constant 0 : index
    %231 = vector.load %arg21[%c20_338, %c0_339] : memref<72x64xf32, #tpu.memory_space<vmem>>, vector<16x64xf32>
    %c0_340 = arith.constant 0 : index
    %c320_341 = arith.constant 320 : index
    %232 = vector.load %arg22[%c0_340, %c320_341] : memref<32x384xf32, #tpu.memory_space<vmem>>, vector<16x64xf32>
    tpu.vector_store %arg22[%c0_340, %c320_341], %231 {strides = array<i32>} : memref<32x384xf32, #tpu.memory_space<vmem>>, vector<16x64xf32>,
    %c56_342 = arith.constant 56 : index
    %c0_343 = arith.constant 0 : index
    %233 = vector.load %arg21[%c56_342, %c0_343] : memref<72x64xf32, #tpu.memory_space<vmem>>, vector<16x64xf32>
    %c16_344 = arith.constant 16 : index
    %c320_345 = arith.constant 320 : index
    %234 = vector.load %arg22[%c16_344, %c320_345] : memref<32x384xf32, #tpu.memory_space<vmem>>, vector<16x64xf32>
    tpu.vector_store %arg22[%c16_344, %c320_345], %233 {strides = array<i32>} : memref<32x384xf32, #tpu.memory_space<vmem>>, vector<16x64xf32>,
    %c0_346 = arith.constant 0 : index
    %c0_347 = arith.constant 0 : index
    %235 = vector.load %arg22[%c0_346, %c0_347] : memref<32x384xf32, #tpu.memory_space<vmem>>, vector<32x384xf32>
    %cst_348 = arith.constant dense<0.000000e+00> : vector<32x64xf32>
    %236 = tpu.matmul %235, %174, %cst_348 {dimension_numbers = #tpu.dot_dimension_numbers<[1], [0], [0], [1], [0, 0, 1, 1], [], []>} : vector<32x384xf32>, vector<384x64xf32>, vector<32x64xf32> -> vector<32x64xf32>
    %237 = vector.broadcast %175 : vector<1x64xf32> to vector<32x64xf32>
    %238 = arith.addf %236, %237 : vector<32x64xf32>
    %cst_349 = arith.constant 0.000000e+00 : f32
    %239 = vector.broadcast %cst_349 : f32 to vector<32x64xf32>
    %240 = arith.maximumf %238, %239 : vector<32x64xf32>
    %241 = arith.addf %240, %206 : vector<32x64xf32>
    %cst_350 = arith.constant 0.000000e+00 : f32
    %242 = vector.broadcast %cst_350 : f32 to vector<32x64xf32>
    %243 = arith.maximumf %241, %242 : vector<32x64xf32>
    %244 = vector.extract_strided_slice %243 {offsets = [0, 0], sizes = [16, 64], strides = [1, 1]} : vector<32x64xf32> to vector<16x64xf32>
    %c20_351 = arith.constant 20 : index
    %c0_352 = arith.constant 0 : index
    %245 = vector.load %arg20[%c20_351, %c0_352] : memref<72x64xf32, #tpu.memory_space<vmem>>, vector<16x64xf32>
    tpu.vector_store %arg20[%c20_351, %c0_352], %244 {strides = array<i32>} : memref<72x64xf32, #tpu.memory_space<vmem>>, vector<16x64xf32>,
    %246 = vector.extract_strided_slice %243 {offsets = [16, 0], sizes = [16, 64], strides = [1, 1]} : vector<32x64xf32> to vector<16x64xf32>
    %c56_353 = arith.constant 56 : index
    %c0_354 = arith.constant 0 : index
    %247 = vector.load %arg20[%c56_353, %c0_354] : memref<72x64xf32, #tpu.memory_space<vmem>>, vector<16x64xf32>
    tpu.vector_store %arg20[%c56_353, %c0_354], %246 {strides = array<i32>} : memref<72x64xf32, #tpu.memory_space<vmem>>, vector<16x64xf32>,
    %c0_355 = arith.constant 0 : index
    %c0_356 = arith.constant 0 : index
    %248 = vector.load %arg17[%c0_355, %c0_356] : memref<64x3xf32, #tpu.memory_space<vmem>>, vector<64x3xf32>
    %c0_357 = arith.constant 0 : index
    %c0_358 = arith.constant 0 : index
    %249 = vector.load %arg18[%c0_357, %c0_358] : memref<1x3xf32, #tpu.memory_space<vmem>>, vector<1x3xf32>
    %c35 = arith.constant 35 : index
    %c0_359 = arith.constant 0 : index
    %250 = vector.load %arg20[%c35, %c0_359] : memref<72x64xf32, #tpu.memory_space<vmem>>, vector<1x64xf32>
    %c0_360 = arith.constant 0 : index
    %c0_361 = arith.constant 0 : index
    %251 = vector.load %arg22[%c0_360, %c0_361] : memref<32x384xf32, #tpu.memory_space<vmem>>, vector<1x64xf32>
    tpu.vector_store %arg22[%c0_360, %c0_361], %250 {strides = array<i32>} : memref<32x384xf32, #tpu.memory_space<vmem>>, vector<1x64xf32>,
    %c71 = arith.constant 71 : index
    %c0_362 = arith.constant 0 : index
    %252 = vector.load %arg20[%c71, %c0_362] : memref<72x64xf32, #tpu.memory_space<vmem>>, vector<1x64xf32>
    %c1_363 = arith.constant 1 : index
    %c0_364 = arith.constant 0 : index
    %253 = vector.load %arg22[%c1_363, %c0_364] : memref<32x384xf32, #tpu.memory_space<vmem>>, vector<1x64xf32>
    tpu.vector_store %arg22[%c1_363, %c0_364], %252 {strides = array<i32>} : memref<32x384xf32, #tpu.memory_space<vmem>>, vector<1x64xf32>,
    %c0_365 = arith.constant 0 : index
    %c0_366 = arith.constant 0 : index
    %254 = vector.load %arg22[%c0_365, %c0_366] : memref<32x384xf32, #tpu.memory_space<vmem>>, vector<2x64xf32>
    %cst_367 = arith.constant dense<0.000000e+00> : vector<2x3xf32>
    %255 = tpu.matmul %254, %248, %cst_367 {dimension_numbers = #tpu.dot_dimension_numbers<[1], [0], [0], [1], [0, 0, 1, 1], [], []>} : vector<2x64xf32>, vector<64x3xf32>, vector<2x3xf32> -> vector<2x3xf32>
    %256 = vector.broadcast %249 : vector<1x3xf32> to vector<2x3xf32>
    %257 = arith.addf %255, %256 : vector<2x3xf32>
    %cst_368 = arith.constant 0.000000e+00 : f32
    %258 = vector.broadcast %cst_368 : f32 to vector<2x3xf32>
    %259 = arith.maximumf %257, %258 : vector<2x3xf32>
    %c0_369 = arith.constant 0 : index
    %c0_370 = arith.constant 0 : index
    %260 = vector.load %arg19[%c0_369, %c0_370] : memref<2x3xf32, #tpu.memory_space<vmem>>, vector<2x3xf32>
    tpu.vector_store %arg19[%c0_369, %c0_370], %259 {strides = array<i32>} : memref<2x3xf32, #tpu.memory_space<vmem>>, vector<2x3xf32>,
    return
  }
}

</mosaic_0001>

<llo_original>
// kernel: forward.1
$region0: #{forward.1}
  #allocation0 [shape = 'u32[]', space=smem, size = 0x4, offset = 0x4, fixed_abs, tag = 'smem constant byte address 0x4 - core index']
  #allocation1 [shape = 'u32[72,128]{1,0:T(1,128)}', space=vmem, size = 0x9000, scoped, tag = 'internal scratch']
  #allocation2 [shape = 'f32[72,64]{1,0:T(8,128)}', space=vmem, size = 0x9000, scoped, tag = 'scratch operand']
  #allocation3 [shape = 'f32[72,64]{1,0:T(8,128)}', space=vmem, size = 0x9000, scoped, tag = 'scratch operand']
  #allocation4 [shape = 'f32[32,384]{1,0:T(8,128)}', space=vmem, size = 0xc000, scoped, tag = 'scratch operand']
  %s0 = inlined_call_operand.vmem [shape: f32[2,16,4], index: 0, kind: input, shape index: {}]
  %s1 = inlined_call_operand.vmem [shape: f32[24,32], index: 1, kind: input, shape index: {}]
  %s2 = inlined_call_operand.vmem [shape: f32[1,32], index: 2, kind: input, shape index: {}]
  %s3 = inlined_call_operand.vmem [shape: f32[192,32], index: 3, kind: input, shape index: {}]
  %s4 = inlined_call_operand.vmem [shape: f32[1,32], index: 4, kind: input, shape index: {}]
  %s5 = inlined_call_operand.vmem [shape: f32[4,32], index: 5, kind: input, shape index: {}]
  %s6 = inlined_call_operand.vmem [shape: f32[1,32], index: 6, kind: input, shape index: {}]
  %s7 = inlined_call_operand.vmem [shape: f32[192,64], index: 7, kind: input, shape index: {}]
  %s8 = inlined_call_operand.vmem [shape: f32[1,64], index: 8, kind: input, shape index: {}]
  %s9 = inlined_call_operand.vmem [shape: f32[384,64], index: 9, kind: input, shape index: {}]
  %s10 = inlined_call_operand.vmem [shape: f32[1,64], index: 10, kind: input, shape index: {}]
  %s11 = inlined_call_operand.vmem [shape: f32[32,64], index: 11, kind: input, shape index: {}]
  %s12 = inlined_call_operand.vmem [shape: f32[1,64], index: 12, kind: input, shape index: {}]
  %s13 = inlined_call_operand.vmem [shape: f32[384,64], index: 13, kind: input, shape index: {}]
  %s14 = inlined_call_operand.vmem [shape: f32[1,64], index: 14, kind: input, shape index: {}]
  %s15 = inlined_call_operand.vmem [shape: f32[384,64], index: 15, kind: input, shape index: {}]
  %s16 = inlined_call_operand.vmem [shape: f32[1,64], index: 16, kind: input, shape index: {}]
  %s17 = inlined_call_operand.vmem [shape: f32[64,3], index: 17, kind: input, shape index: {}]
  %s18 = inlined_call_operand.vmem [shape: f32[1,3], index: 18, kind: input, shape index: {}]
  %s19 = inlined_call_operand.hbm [shape: f32[2,3], index: 19, kind: output, shape index: {}]
  %s20 = sld [smem:[#allocation0]]
  $region86: #{forward.1} parent=0
    _
  %s22 = ssub.s32 1, %s20
  %s23 = scalar_select 0, %s22, %s20
  $region1: #{forward.1} parent=0
    #allocation5 [shape = 'u8[1024]{0}', space=vmem, size = 0x400, scoped, tag = 'output window, operand 0, single buffered']
    #allocation6 [shape = 's32[1]{0}', space=sflag, size = 0x4, scoped, tag = 'scoped memory for forward.1']
    %24 = vsyncpa [#allocation6], 0
    // Predicated region
    $region2: #{forward.1} parent=1 // pred_check
      _
    $region3: #{forward.1} parent=1 // pred_check_branch
      %26 = sbr.rel (0) target = $region5
    $region4: #{forward.1} parent=1 // pred_region
      _
    $region5: #{forward.1} parent=1 // pred_fallthru
      _
    // Predicated region
    $region6: #{forward.1} parent=1 // pred_check
      _
    $region7: #{forward.1} parent=1 // pred_check_branch
      %28 = sbr.rel (0) target = $region9
    $region8: #{forward.1} parent=1 // pred_region
      _
    $region9: #{forward.1} parent=1 // pred_fallthru
      _
    // Predicated region
    $region10: #{forward.1} parent=1 // pred_check
      _
    $region11: #{forward.1} parent=1 // pred_check_branch
      %30 = sbr.rel (0) target = $region13
    $region12: #{forward.1} parent=1 // pred_region
      _
    $region13: #{forward.1} parent=1 // pred_fallthru
      _
    // Predicated region
    $region14: #{forward.1} parent=1 // pred_check
      _
    $region15: #{forward.1} parent=1 // pred_check_branch
      %32 = sbr.rel (0) target = $region17
    $region16: #{forward.1} parent=1 // pred_region
      _
    $region17: #{forward.1} parent=1 // pred_fallthru
      _
    // Predicated region
    $region18: #{forward.1} parent=1 // pred_check
      _
    $region19: #{forward.1} parent=1 // pred_check_branch
      %34 = sbr.rel (0) target = $region21
    $region20: #{forward.1} parent=1 // pred_region
      _
    $region21: #{forward.1} parent=1 // pred_fallthru
      _
    // Predicated region
    $region22: #{forward.1} parent=1 // pred_check
      _
    $region23: #{forward.1} parent=1 // pred_check_branch
      %36 = sbr.rel (0) target = $region25
    $region24: #{forward.1} parent=1 // pred_region
      _
    $region25: #{forward.1} parent=1 // pred_fallthru
      _
    // Predicated region
    $region26: #{forward.1} parent=1 // pred_check
      _
    $region27: #{forward.1} parent=1 // pred_check_branch
      %38 = sbr.rel (0) target = $region29
    $region28: #{forward.1} parent=1 // pred_region
      _
    $region29: #{forward.1} parent=1 // pred_fallthru
      _
    // Predicated region
    $region30: #{forward.1} parent=1 // pred_check
      _
    $region31: #{forward.1} parent=1 // pred_check_branch
      %40 = sbr.rel (0) target = $region33
    $region32: #{forward.1} parent=1 // pred_region
      _
    $region33: #{forward.1} parent=1 // pred_fallthru
      _
    // Predicated region
    $region34: #{forward.1} parent=1 // pred_check
      _
    $region35: #{forward.1} parent=1 // pred_check_branch
      %42 = sbr.rel (0) target = $region37
    $region36: #{forward.1} parent=1 // pred_region
      _
    $region37: #{forward.1} parent=1 // pred_fallthru
      _
    // Predicated region
    $region38: #{forward.1} parent=1 // pred_check
      _
    $region39: #{forward.1} parent=1 // pred_check_branch
      %44 = sbr.rel (0) target = $region41
    $region40: #{forward.1} parent=1 // pred_region
      _
    $region41: #{forward.1} parent=1 // pred_fallthru
      _
    // Predicated region
    $region42: #{forward.1} parent=1 // pred_check
      _
    $region43: #{forward.1} parent=1 // pred_check_branch
      %46 = sbr.rel (0) target = $region45
    $region44: #{forward.1} parent=1 // pred_region
      _
    $region45: #{forward.1} parent=1 // pred_fallthru
      _
    // Predicated region
    $region46: #{forward.1} parent=1 // pred_check
      _
    $region47: #{forward.1} parent=1 // pred_check_branch
      %48 = sbr.rel (0) target = $region49
    $region48: #{forward.1} parent=1 // pred_region
      _
    $region49: #{forward.1} parent=1 // pred_fallthru
      _
    // Predicated region
    $region50: #{forward.1} parent=1 // pred_check
      _
    $region51: #{forward.1} parent=1 // pred_check_branch
      %50 = sbr.rel (0) target = $region53
    $region52: #{forward.1} parent=1 // pred_region
      _
    $region53: #{forward.1} parent=1 // pred_fallthru
      _
    // Predicated region
    $region54: #{forward.1} parent=1 // pred_check
      _
    $region55: #{forward.1} parent=1 // pred_check_branch
      %52 = sbr.rel (0) target = $region57
    $region56: #{forward.1} parent=1 // pred_region
      _
    $region57: #{forward.1} parent=1 // pred_fallthru
      _
    // Predicated region
    $region58: #{forward.1} parent=1 // pred_check
      _
    $region59: #{forward.1} parent=1 // pred_check_branch
      %54 = sbr.rel (0) target = $region61
    $region60: #{forward.1} parent=1 // pred_region
      _
    $region61: #{forward.1} parent=1 // pred_fallthru
      _
    // Predicated region
    $region62: #{forward.1} parent=1 // pred_check
      _
    $region63: #{forward.1} parent=1 // pred_check_branch
      %56 = sbr.rel (0) target = $region65
    $region64: #{forward.1} parent=1 // pred_region
      _
    $region65: #{forward.1} parent=1 // pred_fallthru
      _
    // Predicated region
    $region66: #{forward.1} parent=1 // pred_check
      _
    $region67: #{forward.1} parent=1 // pred_check_branch
      %58 = sbr.rel (0) target = $region69
    $region68: #{forward.1} parent=1 // pred_region
      _
    $region69: #{forward.1} parent=1 // pred_fallthru
      _
    // Predicated region
    $region70: #{forward.1} parent=1 // pred_check
      _
    $region71: #{forward.1} parent=1 // pred_check_branch
      %60 = sbr.rel (0) target = $region73
    $region72: #{forward.1} parent=1 // pred_region
      _
    $region73: #{forward.1} parent=1 // pred_fallthru
      _
    // Predicated region
    $region74: #{forward.1} parent=1 // pred_check
      _
    $region75: #{forward.1} parent=1 // pred_check_branch
      %62 = sbr.rel (0) target = $region77
    $region76: #{forward.1} parent=1 // pred_region
      _
    $region77: #{forward.1} parent=1 // pred_fallthru
      _
    %vm63 = vcmask 523264
    %64 = vst.msk [vmem:[#allocation2] sm:$0xff] %vm63, 0.0
    %65 = vst.msk [vmem:[#allocation2 + $0x8] sm:$0xff] %vm63, 0.0
    %66 = vst.msk [vmem:[#allocation2 + $0x10] sm:$0xff] %vm63, 0.0
    %67 = vst.msk [vmem:[#allocation2 + $0x18] sm:$0xff] %vm63, 0.0
    %68 = vst.msk [vmem:[#allocation2 + $0x20] sm:$0xff] %vm63, 0.0
    %69 = vst.msk [vmem:[#allocation2 + $0x28] sm:$0xff] %vm63, 0.0
    %70 = vst.msk [vmem:[#allocation2 + $0x30] sm:$0xff] %vm63, 0.0
    %71 = vst.msk [vmem:[#allocation2 + $0x38] sm:$0xff] %vm63, 0.0
    %72 = vst.msk [vmem:[#allocation2 + $0x40] sm:$0xff] %vm63, 0.0
    %73 = vst.msk [vmem:[#allocation3] sm:$0xff] %vm63, 0.0
    %74 = vst.msk [vmem:[#allocation3 + $0x8] sm:$0xff] %vm63, 0.0
    %75 = vst.msk [vmem:[#allocation3 + $0x10] sm:$0xff] %vm63, 0.0
    %76 = vst.msk [vmem:[#allocation3 + $0x18] sm:$0xff] %vm63, 0.0
    %77 = vst.msk [vmem:[#allocation3 + $0x20] sm:$0xff] %vm63, 0.0
    %78 = vst.msk [vmem:[#allocation3 + $0x28] sm:$0xff] %vm63, 0.0
    %79 = vst.msk [vmem:[#allocation3 + $0x30] sm:$0xff] %vm63, 0.0
    %80 = vst.msk [vmem:[#allocation3 + $0x38] sm:$0xff] %vm63, 0.0
    %81 = vst.msk [vmem:[#allocation3 + $0x40] sm:$0xff] %vm63, 0.0
    %v82 = vld [vmem:[%s0] sm:$0xff]
    %v83 = vld [vmem:[%s0 + $0x8] sm:$0xff]
    %vm84 = vcmask 31744
    %85 = vst.msk [vmem:[#allocation2 + $0x14] sm:$0xff] %vm84, %v82
    %86 = vst.msk [vmem:[#allocation2 + $0x1c] sm:$0xff] %vm84, %v83
    %s87 = scalar_lea.vmem %s0, 16
    %v88 = vld [vmem:[%s87] sm:$0xff]
    %v89 = vld [vmem:[%s87 + $0x8] sm:$0xff]
    %90 = vst.msk [vmem:[#allocation2 + $0x38] sm:$0xff] %vm84, %v88
    %91 = vst.msk [vmem:[#allocation2 + $0x40] sm:$0xff] %vm84, %v89
    %v92 = vld [vmem:[%s1] sm:$0xff]
    %v93 = vld [vmem:[%s1 + $0x8] sm:$0xff]
    %v94 = vld [vmem:[%s1 + $0x10] sm:$0xff]
    %v95 = vld [vmem:[%s2] sm:$0x1]
    %v96 = vld [vmem:[%s3] sm:$0xff]
    %v97 = vld [vmem:[%s3 + $0x8] sm:$0xff]
    %v98 = vld [vmem:[%s3 + $0x10] sm:$0xff]
    %v99 = vld [vmem:[%s3 + $0x18] sm:$0xff]
    %v100 = vld [vmem:[%s3 + $0x20] sm:$0xff]
    %v101 = vld [vmem:[%s3 + $0x28] sm:$0xff]
    %v102 = vld [vmem:[%s3 + $0x30] sm:$0xff]
    %v103 = vld [vmem:[%s3 + $0x38] sm:$0xff]
    %v104 = vld [vmem:[%s3 + $0x40] sm:$0xff]
    %v105 = vld [vmem:[%s3 + $0x48] sm:$0xff]
    %v106 = vld [vmem:[%s3 + $0x50] sm:$0xff]
    %v107 = vld [vmem:[%s3 + $0x58] sm:$0xff]
    %v108 = vld [vmem:[%s3 + $0x60] sm:$0xff]
    %v109 = vld [vmem:[%s3 + $0x68] sm:$0xff]
    %v110 = vld [vmem:[%s3 + $0x70] sm:$0xff]
    %v111 = vld [vmem:[%s3 + $0x78] sm:$0xff]
    %v112 = vld [vmem:[%s3 + $0x80] sm:$0xff]
    %v113 = vld [vmem:[%s3 + $0x88] sm:$0xff]
    %v114 = vld [vmem:[%s3 + $0x90] sm:$0xff]
    %v115 = vld [vmem:[%s3 + $0x98] sm:$0xff]
    %v116 = vld [vmem:[%s3 + $0xa0] sm:$0xff]
    %v117 = vld [vmem:[%s3 + $0xa8] sm:$0xff]
    %v118 = vld [vmem:[%s3 + $0xb0] sm:$0xff]
    %v119 = vld [vmem:[%s3 + $0xb8] sm:$0xff]
    %v120 = vld [vmem:[%s4] sm:$0x1]
    %v121 = vld [vmem:[#allocation2 + $0xf] sm:$0xff]
    %v122 = vld [vmem:[#allocation2 + $0x17] sm:$0xff]
    %123 = vst.msk [vmem:[#allocation4] sm:$0xff] %vm84, %v121
    %124 = vst.msk [vmem:[#allocation4 + $0x18] sm:$0xff] %vm84, %v122
    %v125 = vld [vmem:[#allocation2 + $0x33] sm:$0xff]
    %v126 = vld [vmem:[#allocation2 + $0x3b] sm:$0xff]
    %127 = vst.msk [vmem:[#allocation4 + $0x30] sm:$0xff] %vm84, %v125
    %128 = vst.msk [vmem:[#allocation4 + $0x48] sm:$0xff] %vm84, %v126
    %v129 = vld [vmem:[#allocation2 + $0x10] sm:$0xff]
    %v130 = vld [vmem:[#allocation2 + $0x18] sm:$0xff]
    %133 = vrot.lane.b32.xlu0 %v129, 4
    %v134 = vpop.permute.xlu0 %133
    %135 = vrot.lane.b32.xlu0 %v130, 4
    %v136 = vpop.permute.xlu0 %135
    %vm139 = vcmask 64544
    %140 = vst.msk [vmem:[#allocation4] sm:$0xff] %vm139, %v134
    %141 = vst.msk [vmem:[#allocation4 + $0x18] sm:$0xff] %vm139, %v136
    %v142 = vld [vmem:[#allocation2 + $0x34] sm:$0xff]
    %v143 = vld [vmem:[#allocation2 + $0x3c] sm:$0xff]
    %146 = vrot.lane.b32.xlu0 %v142, 4
    %v147 = vpop.permute.xlu0 %146
    %148 = vrot.lane.b32.xlu0 %v143, 4
    %v149 = vpop.permute.xlu0 %148
    %152 = vst.msk [vmem:[#allocation4 + $0x30] sm:$0xff] %vm139, %v147
    %153 = vst.msk [vmem:[#allocation4 + $0x48] sm:$0xff] %vm139, %v149
    %v154 = vld [vmem:[#allocation2 + $0x11] sm:$0xff]
    %v155 = vld [vmem:[#allocation2 + $0x19] sm:$0xff]
    %158 = vrot.lane.b32.xlu0 %v154, 8
    %v159 = vpop.permute.xlu0 %158
    %160 = vrot.lane.b32.xlu0 %v155, 8
    %v161 = vpop.permute.xlu0 %160
    %vm164 = vcmask 97344
    %165 = vst.msk [vmem:[#allocation4] sm:$0xff] %vm164, %v159
    %166 = vst.msk [vmem:[#allocation4 + $0x18] sm:$0xff] %vm164, %v161
    %v167 = vld [vmem:[#allocation2 + $0x35] sm:$0xff]
    %v168 = vld [vmem:[#allocation2 + $0x3d] sm:$0xff]
    %171 = vrot.lane.b32.xlu0 %v167, 8
    %v172 = vpop.permute.xlu0 %171
    %173 = vrot.lane.b32.xlu0 %v168, 8
    %v174 = vpop.permute.xlu0 %173
    %177 = vst.msk [vmem:[#allocation4 + $0x30] sm:$0xff] %vm164, %v172
    %178 = vst.msk [vmem:[#allocation4 + $0x48] sm:$0xff] %vm164, %v174
    %v179 = vld [vmem:[#allocation2 + $0x12] sm:$0xff]
    %v180 = vld [vmem:[#allocation2 + $0x1a] sm:$0xff]
    %183 = vrot.lane.b32.xlu0 %v179, 12
    %v184 = vpop.permute.xlu0 %183
    %185 = vrot.lane.b32.xlu0 %v180, 12
    %v186 = vpop.permute.xlu0 %185
    %vm189 = vcmask 130144
    %190 = vst.msk [vmem:[#allocation4] sm:$0xff] %vm189, %v184
    %191 = vst.msk [vmem:[#allocation4 + $0x18] sm:$0xff] %vm189, %v186
    %v192 = vld [vmem:[#allocation2 + $0x36] sm:$0xff]
    %v193 = vld [vmem:[#allocation2 + $0x3e] sm:$0xff]
    %196 = vrot.lane.b32.xlu0 %v192, 12
    %v197 = vpop.permute.xlu0 %196
    %198 = vrot.lane.b32.xlu0 %v193, 12
    %v199 = vpop.permute.xlu0 %198
    %202 = vst.msk [vmem:[#allocation4 + $0x30] sm:$0xff] %vm189, %v197
    %203 = vst.msk [vmem:[#allocation4 + $0x48] sm:$0xff] %vm189, %v199
    %v204 = vld [vmem:[#allocation2 + $0x13] sm:$0xff]
    %v205 = vld [vmem:[#allocation2 + $0x1b] sm:$0xff]
    %208 = vrot.lane.b32.xlu0 %v204, 16
    %v209 = vpop.permute.xlu0 %208
    %210 = vrot.lane.b32.xlu0 %v205, 16
    %v211 = vpop.permute.xlu0 %210
    %vm214 = vcmask 162944
    %215 = vst.msk [vmem:[#allocation4] sm:$0xff] %vm214, %v209
    %216 = vst.msk [vmem:[#allocation4 + $0x18] sm:$0xff] %vm214, %v211
    %v217 = vld [vmem:[#allocation2 + $0x37] sm:$0xff]
    %v218 = vld [vmem:[#allocation2 + $0x3f] sm:$0xff]
    %221 = vrot.lane.b32.xlu0 %v217, 16
    %v222 = vpop.permute.xlu0 %221
    %223 = vrot.lane.b32.xlu0 %v218, 16
    %v224 = vpop.permute.xlu0 %223
    %227 = vst.msk [vmem:[#allocation4 + $0x30] sm:$0xff] %vm214, %v222
    %228 = vst.msk [vmem:[#allocation4 + $0x48] sm:$0xff] %vm214, %v224
    %v229 = vld [vmem:[#allocation2 + $0x14] sm:$0xff]
    %v230 = vld [vmem:[#allocation2 + $0x1c] sm:$0xff]
    %233 = vrot.lane.b32.xlu0 %v229, 20
    %v234 = vpop.permute.xlu0 %233
    %235 = vrot.lane.b32.xlu0 %v230, 20
    %v236 = vpop.permute.xlu0 %235
    %vm239 = vcmask 195744
    %240 = vst.msk [vmem:[#allocation4] sm:$0xff] %vm239, %v234
    %241 = vst.msk [vmem:[#allocation4 + $0x18] sm:$0xff] %vm239, %v236
    %v242 = vld [vmem:[#allocation2 + $0x38] sm:$0xff]
    %v243 = vld [vmem:[#allocation2 + $0x40] sm:$0xff]
    %246 = vrot.lane.b32.xlu0 %v242, 20
    %v247 = vpop.permute.xlu0 %246
    %248 = vrot.lane.b32.xlu0 %v243, 20
    %v249 = vpop.permute.xlu0 %248
    %252 = vst.msk [vmem:[#allocation4 + $0x30] sm:$0xff] %vm239, %v247
    %253 = vst.msk [vmem:[#allocation4 + $0x48] sm:$0xff] %vm239, %v249
    %v254 = vld [vmem:[#allocation4] sm:$0xff]
    %v255 = vld [vmem:[#allocation4 + $0x18] sm:$0xff]
    %v256 = vld [vmem:[#allocation4 + $0x30] sm:$0xff]
    %v257 = vld [vmem:[#allocation4 + $0x48] sm:$0xff]
    %v259 = vperm.slane %v95, 0
    %vm261 = vcmask 195584
    %v263 = vsel %vm261, %v254, 0
    %v266 = vsel %vm261, %v255, 0
    %v269 = vsel %vm261, %v256, 0
    %v272 = vsel %vm261, %v257, 0
    %274 = vmatpush.msra.mxu0 0.0
    %275 = vmatpush.msra.mxu0 0.0
    %276 = vmatpush.msra.mxu0 0.0
    %277 = vmatpush.msra.mxu0 0.0
    %278 = vmatpush.msra.mxu0 0.0
    %279 = vmatpush.msra.mxu0 0.0
    %280 = vmatpush.msra.mxu0 0.0
    %281 = vmatpush.msra.mxu0 0.0
    %282 = vmatpush.msra.mxu0 0.0
    %283 = vmatpush.msra.mxu0 0.0
    %284 = vmatpush.msra.mxu0 0.0
    %285 = vmatpush.msra.mxu0 0.0
    %286 = vmatpush.msra.mxu0 0.0
    %287 = vmatpush.msra.mxu0 %v94
    %288 = vmatpush.msra.mxu0 %v93
    %289 = vmatpush.msra.mxu0 %v92
    %290 = vmatmul.f32.gmra.mxu0 %v263
    %v291 = vpop.f32.mrf.mxu0
    %v292 = vadd.f32 %v259, %v291
    %293 = vmatmul.f32.gmra.mxu0 %v266
    %v294 = vpop.f32.mrf.mxu0
    %v295 = vadd.f32 %v259, %v294
    %296 = vmatmul.f32.gmra.mxu0 %v269
    %v297 = vpop.f32.mrf.mxu0
    %v298 = vadd.f32 %v259, %v297
    %299 = vmatmul.f32.gmra.mxu0 %v272
    %v300 = vpop.f32.mrf.mxu0
    %v301 = vadd.f32 %v259, %v300
    %302 = vdwg.mxu0
    %v303 = vmax.f32 %v292, 0.0
    %v304 = vmax.f32 %v295, 0.0
    %v305 = vmax.f32 %v298, 0.0
    %v306 = vmax.f32 %v301, 0.0
    %v307 = vld [vmem:[%s5] sm:$0xf]
    %v308 = vld [vmem:[%s6] sm:$0x1]
    %v310 = vperm.slane %v308, 0
    %312 = vrot.lane.b32.xlu0 %v254, 108
    %v313 = vpop.permute.xlu0 %312
    %314 = vrot.lane.b32.xlu0 %v255, 108
    %v315 = vpop.permute.xlu0 %314
    %316 = vrot.lane.b32.xlu0 %v256, 108
    %v317 = vpop.permute.xlu0 %316
    %318 = vrot.lane.b32.xlu0 %v257, 108
    %v319 = vpop.permute.xlu0 %318
    %v320 = vsel %vm84, %v313, 0
    %v322 = vsel %vm84, %v315, 0
    %v324 = vsel %vm84, %v317, 0
    %v326 = vsel %vm84, %v319, 0
    %vm328 = vcmask 1043456
    %v330 = vsel %vm328, %v307, 0
    %332 = vmatpush.msra.mxu0 0.0
    %333 = vmatpush.msra.mxu0 0.0
    %334 = vmatpush.msra.mxu0 0.0
    %335 = vmatpush.msra.mxu0 0.0
    %336 = vmatpush.msra.mxu0 0.0
    %337 = vmatpush.msra.mxu0 0.0
    %338 = vmatpush.msra.mxu0 0.0
    %339 = vmatpush.msra.mxu0 0.0
    %340 = vmatpush.msra.mxu0 0.0
    %341 = vmatpush.msra.mxu0 0.0
    %342 = vmatpush.msra.mxu0 0.0
    %343 = vmatpush.msra.mxu0 0.0
    %344 = vmatpush.msra.mxu0 0.0
    %345 = vmatpush.msra.mxu0 0.0
    %346 = vmatpush.msra.mxu0 0.0
    %347 = vmatpush.msra.mxu0 %v330
    %348 = vmatmul.f32.gmra.mxu0 %v320
    %v349 = vpop.f32.mrf.mxu0
    %v350 = vadd.f32 %v310, %v349
    %351 = vmatmul.f32.gmra.mxu0 %v322
    %v352 = vpop.f32.mrf.mxu0
    %v353 = vadd.f32 %v310, %v352
    %354 = vmatmul.f32.gmra.mxu0 %v324
    %v355 = vpop.f32.mrf.mxu0
    %v356 = vadd.f32 %v310, %v355
    %357 = vmatmul.f32.gmra.mxu0 %v326
    %v358 = vpop.f32.mrf.mxu0
    %v359 = vadd.f32 %v310, %v358
    %360 = vdwg.mxu0
    %vm361 = vcmask 261120
    %362 = vst.msk [vmem:[#allocation3 + $0x14] sm:$0xff] %vm361, %v303
    %363 = vst.msk [vmem:[#allocation3 + $0x1c] sm:$0xff] %vm361, %v304
    %364 = vst.msk [vmem:[#allocation3 + $0x38] sm:$0xff] %vm361, %v305
    %365 = vst.msk [vmem:[#allocation3 + $0x40] sm:$0xff] %vm361, %v306
    %v366 = vld [vmem:[#allocation3 + $0xf] sm:$0xff]
    %v367 = vld [vmem:[#allocation3 + $0x17] sm:$0xff]
    %368 = vst.msk [vmem:[#allocation4] sm:$0xff] %vm361, %v366
    %369 = vst.msk [vmem:[#allocation4 + $0x18] sm:$0xff] %vm361, %v367
    %v370 = vld [vmem:[#allocation3 + $0x33] sm:$0xff]
    %v371 = vld [vmem:[#allocation3 + $0x3b] sm:$0xff]
    %372 = vst.msk [vmem:[#allocation4 + $0x30] sm:$0xff] %vm361, %v370
    %373 = vst.msk [vmem:[#allocation4 + $0x48] sm:$0xff] %vm361, %v371
    %v374 = vld [vmem:[#allocation3 + $0x10] sm:$0xff]
    %v375 = vld [vmem:[#allocation3 + $0x18] sm:$0xff]
    %378 = vrot.lane.b32.xlu0 %v374, 32
    %v379 = vpop.permute.xlu0 %378
    %380 = vrot.lane.b32.xlu0 %v375, 32
    %v381 = vpop.permute.xlu0 %380
    %vm384 = vcmask 523520
    %385 = vst.msk [vmem:[#allocation4] sm:$0xff] %vm384, %v379
    %386 = vst.msk [vmem:[#allocation4 + $0x18] sm:$0xff] %vm384, %v381
    %v387 = vld [vmem:[#allocation3 + $0x34] sm:$0xff]
    %v388 = vld [vmem:[#allocation3 + $0x3c] sm:$0xff]
    %391 = vrot.lane.b32.xlu0 %v387, 32
    %v392 = vpop.permute.xlu0 %391
    %393 = vrot.lane.b32.xlu0 %v388, 32
    %v394 = vpop.permute.xlu0 %393
    %397 = vst.msk [vmem:[#allocation4 + $0x30] sm:$0xff] %vm384, %v392
    %398 = vst.msk [vmem:[#allocation4 + $0x48] sm:$0xff] %vm384, %v394
    %v399 = vld [vmem:[#allocation3 + $0x11] sm:$0xff]
    %v400 = vld [vmem:[#allocation3 + $0x19] sm:$0xff]
    %403 = vrot.lane.b32.xlu0 %v399, 64
    %v404 = vpop.permute.xlu0 %403
    %405 = vrot.lane.b32.xlu0 %v400, 64
    %v406 = vpop.permute.xlu0 %405
    %vm409 = vcmask 785920
    %410 = vst.msk [vmem:[#allocation4] sm:$0xff] %vm409, %v404
    %411 = vst.msk [vmem:[#allocation4 + $0x18] sm:$0xff] %vm409, %v406
    %v412 = vld [vmem:[#allocation3 + $0x35] sm:$0xff]
    %v413 = vld [vmem:[#allocation3 + $0x3d] sm:$0xff]
    %416 = vrot.lane.b32.xlu0 %v412, 64
    %v417 = vpop.permute.xlu0 %416
    %418 = vrot.lane.b32.xlu0 %v413, 64
    %v419 = vpop.permute.xlu0 %418
    %422 = vst.msk [vmem:[#allocation4 + $0x30] sm:$0xff] %vm409, %v417
    %423 = vst.msk [vmem:[#allocation4 + $0x48] sm:$0xff] %vm409, %v419
    %v424 = vld [vmem:[#allocation3 + $0x12] sm:$0xff]
    %v425 = vld [vmem:[#allocation3 + $0x1a] sm:$0xff]
    %428 = vrot.lane.b32.xlu0 %v424, 96
    %v429 = vpop.permute.xlu0 %428
    %430 = vrot.lane.b32.xlu0 %v425, 96
    %v431 = vpop.permute.xlu0 %430
    %vm434 = vcmask 1048320
    %435 = vst.msk [vmem:[#allocation4] sm:$0xff] %vm434, %v429
    %436 = vst.msk [vmem:[#allocation4 + $0x18] sm:$0xff] %vm434, %v431
    %v437 = vld [vmem:[#allocation3 + $0x36] sm:$0xff]
    %v438 = vld [vmem:[#allocation3 + $0x3e] sm:$0xff]
    %441 = vrot.lane.b32.xlu0 %v437, 96
    %v442 = vpop.permute.xlu0 %441
    %443 = vrot.lane.b32.xlu0 %v438, 96
    %v444 = vpop.permute.xlu0 %443
    %447 = vst.msk [vmem:[#allocation4 + $0x30] sm:$0xff] %vm434, %v442
    %448 = vst.msk [vmem:[#allocation4 + $0x48] sm:$0xff] %vm434, %v444
    %v449 = vld [vmem:[#allocation3 + $0x13] sm:$0xff]
    %v450 = vld [vmem:[#allocation3 + $0x1b] sm:$0xff]
    %451 = vst.msk [vmem:[#allocation4 + $0x8] sm:$0xff] %vm361, %v449
    %452 = vst.msk [vmem:[#allocation4 + $0x20] sm:$0xff] %vm361, %v450
    %v453 = vld [vmem:[#allocation3 + $0x37] sm:$0xff]
    %v454 = vld [vmem:[#allocation3 + $0x3f] sm:$0xff]
    %455 = vst.msk [vmem:[#allocation4 + $0x38] sm:$0xff] %vm361, %v453
    %456 = vst.msk [vmem:[#allocation4 + $0x50] sm:$0xff] %vm361, %v454
    %v457 = vld [vmem:[#allocation3 + $0x14] sm:$0xff]
    %v458 = vld [vmem:[#allocation3 + $0x1c] sm:$0xff]
    %461 = vrot.lane.b32.xlu0 %v457, 32
    %v462 = vpop.permute.xlu0 %461
    %463 = vrot.lane.b32.xlu0 %v458, 32
    %v464 = vpop.permute.xlu0 %463
    %467 = vst.msk [vmem:[#allocation4 + $0x8] sm:$0xff] %vm384, %v462
    %468 = vst.msk [vmem:[#allocation4 + $0x20] sm:$0xff] %vm384, %v464
    %v469 = vld [vmem:[#allocation3 + $0x38] sm:$0xff]
    %v470 = vld [vmem:[#allocation3 + $0x40] sm:$0xff]
    %473 = vrot.lane.b32.xlu0 %v469, 32
    %v474 = vpop.permute.xlu0 %473
    %475 = vrot.lane.b32.xlu0 %v470, 32
    %v476 = vpop.permute.xlu0 %475
    %479 = vst.msk [vmem:[#allocation4 + $0x38] sm:$0xff] %vm384, %v474
    %480 = vst.msk [vmem:[#allocation4 + $0x50] sm:$0xff] %vm384, %v476
    %v481 = vld [vmem:[#allocation4] sm:$0xff]
    %v482 = vld [vmem:[#allocation4 + $0x8] sm:$0xff]
    %v483 = vld [vmem:[#allocation4 + $0x18] sm:$0xff]
    %v484 = vld [vmem:[#allocation4 + $0x20] sm:$0xff]
    %v485 = vld [vmem:[#allocation4 + $0x30] sm:$0xff]
    %v486 = vld [vmem:[#allocation4 + $0x38] sm:$0xff]
    %v487 = vld [vmem:[#allocation4 + $0x48] sm:$0xff]
    %v488 = vld [vmem:[#allocation4 + $0x50] sm:$0xff]
    %v490 = vperm.slane %v120, 0
    %v493 = vsel %vm63, %v482, 0
    %v496 = vsel %vm63, %v484, 0
    %v499 = vsel %vm63, %v486, 0
    %v502 = vsel %vm63, %v488, 0
    %504 = vmatpush.msra.mxu0 %v111
    %505 = vmatpush.msra.mxu0 %v110
    %506 = vmatpush.msra.mxu0 %v109
    %507 = vmatpush.msra.mxu0 %v108
    %508 = vmatpush.msra.mxu0 %v107
    %509 = vmatpush.msra.mxu0 %v106
    %510 = vmatpush.msra.mxu0 %v105
    %511 = vmatpush.msra.mxu0 %v104
    %512 = vmatpush.msra.mxu0 %v103
    %513 = vmatpush.msra.mxu0 %v102
    %514 = vmatpush.msra.mxu0 %v101
    %515 = vmatpush.msra.mxu0 %v100
    %516 = vmatpush.msra.mxu0 %v99
    %517 = vmatpush.msra.mxu0 %v98
    %518 = vmatpush.msra.mxu0 %v97
    %519 = vmatpush.msra.mxu0 %v96
    %520 = vmatmul.f32.gmra.mxu0 %v481
    %v521 = vpop.f32.mrf.mxu0
    %v522 = vadd.f32 %v490, %v521
    %523 = vmatmul.f32.gmra.mxu0 %v483
    %v524 = vpop.f32.mrf.mxu0
    %v525 = vadd.f32 %v490, %v524
    %526 = vmatmul.f32.gmra.mxu0 %v485
    %v527 = vpop.f32.mrf.mxu0
    %v528 = vadd.f32 %v490, %v527
    %529 = vmatmul.f32.gmra.mxu0 %v487
    %v530 = vpop.f32.mrf.mxu0
    %v531 = vadd.f32 %v490, %v530
    %532 = vdwg.mxu0
    %533 = vmatpush.msra.mxu0 0.0
    %534 = vmatpush.msra.mxu0 0.0
    %535 = vmatpush.msra.mxu0 0.0
    %536 = vmatpush.msra.mxu0 0.0
    %537 = vmatpush.msra.mxu0 0.0
    %538 = vmatpush.msra.mxu0 0.0
    %539 = vmatpush.msra.mxu0 0.0
    %540 = vmatpush.msra.mxu0 0.0
    %541 = vmatpush.msra.mxu0 %v119
    %542 = vmatpush.msra.mxu0 %v118
    %543 = vmatpush.msra.mxu0 %v117
    %544 = vmatpush.msra.mxu0 %v116
    %545 = vmatpush.msra.mxu0 %v115
    %546 = vmatpush.msra.mxu0 %v114
    %547 = vmatpush.msra.mxu0 %v113
    %548 = vmatpush.msra.mxu0 %v112
    %549 = vmatmul.f32.gmra.mxu0 %v493
    %v550 = vpop.f32.mrf.mxu0
    %v551 = vadd.f32 %v522, %v550
    %552 = vmatmul.f32.gmra.mxu0 %v496
    %v553 = vpop.f32.mrf.mxu0
    %v554 = vadd.f32 %v525, %v553
    %555 = vmatmul.f32.gmra.mxu0 %v499
    %v556 = vpop.f32.mrf.mxu0
    %v557 = vadd.f32 %v528, %v556
    %558 = vmatmul.f32.gmra.mxu0 %v502
    %v559 = vpop.f32.mrf.mxu0
    %v560 = vadd.f32 %v531, %v559
    %561 = vdwg.mxu0
    %v562 = vmax.f32 %v551, 0.0
    %v563 = vmax.f32 %v554, 0.0
    %v564 = vmax.f32 %v557, 0.0
    %v565 = vmax.f32 %v560, 0.0
    %v566 = vadd.f32 %v562, %v350
    %v567 = vadd.f32 %v563, %v353
    %v568 = vadd.f32 %v564, %v356
    %v569 = vadd.f32 %v565, %v359
    %v570 = vmax.f32 %v566, 0.0
    %v571 = vmax.f32 %v567, 0.0
    %v572 = vmax.f32 %v568, 0.0
    %v573 = vmax.f32 %v569, 0.0
    %574 = vst.msk [vmem:[#allocation2 + $0x14] sm:$0xff] %vm361, %v570
    %575 = vst.msk [vmem:[#allocation2 + $0x1c] sm:$0xff] %vm361, %v571
    %576 = vst.msk [vmem:[#allocation2 + $0x38] sm:$0xff] %vm361, %v572
    %577 = vst.msk [vmem:[#allocation2 + $0x40] sm:$0xff] %vm361, %v573
    %v578 = vld [vmem:[%s7] sm:$0xff]
    %v579 = vld [vmem:[%s7 + $0x8] sm:$0xff]
    %v580 = vld [vmem:[%s7 + $0x10] sm:$0xff]
    %v581 = vld [vmem:[%s7 + $0x18] sm:$0xff]
    %v582 = vld [vmem:[%s7 + $0x20] sm:$0xff]
    %v583 = vld [vmem:[%s7 + $0x28] sm:$0xff]
    %v584 = vld [vmem:[%s7 + $0x30] sm:$0xff]
    %v585 = vld [vmem:[%s7 + $0x38] sm:$0xff]
    %v586 = vld [vmem:[%s7 + $0x40] sm:$0xff]
    %v587 = vld [vmem:[%s7 + $0x48] sm:$0xff]
    %v588 = vld [vmem:[%s7 + $0x50] sm:$0xff]
    %v589 = vld [vmem:[%s7 + $0x58] sm:$0xff]
    %v590 = vld [vmem:[%s7 + $0x60] sm:$0xff]
    %v591 = vld [vmem:[%s7 + $0x68] sm:$0xff]
    %v592 = vld [vmem:[%s7 + $0x70] sm:$0xff]
    %v593 = vld [vmem:[%s7 + $0x78] sm:$0xff]
    %v594 = vld [vmem:[%s7 + $0x80] sm:$0xff]
    %v595 = vld [vmem:[%s7 + $0x88] sm:$0xff]
    %v596 = vld [vmem:[%s7 + $0x90] sm:$0xff]
    %v597 = vld [vmem:[%s7 + $0x98] sm:$0xff]
    %v598 = vld [vmem:[%s7 + $0xa0] sm:$0xff]
    %v599 = vld [vmem:[%s7 + $0xa8] sm:$0xff]
    %v600 = vld [vmem:[%s7 + $0xb0] sm:$0xff]
    %v601 = vld [vmem:[%s7 + $0xb8] sm:$0xff]
    %v602 = vld [vmem:[%s8] sm:$0x1]
    %v603 = vld [vmem:[%s9] sm:$0xff]
    %v604 = vld [vmem:[%s9 + $0x8] sm:$0xff]
    %v605 = vld [vmem:[%s9 + $0x10] sm:$0xff]
    %v606 = vld [vmem:[%s9 + $0x18] sm:$0xff]
    %v607 = vld [vmem:[%s9 + $0x20] sm:$0xff]
    %v608 = vld [vmem:[%s9 + $0x28] sm:$0xff]
    %v609 = vld [vmem:[%s9 + $0x30] sm:$0xff]
    %v610 = vld [vmem:[%s9 + $0x38] sm:$0xff]
    %v611 = vld [vmem:[%s9 + $0x40] sm:$0xff]
    %v612 = vld [vmem:[%s9 + $0x48] sm:$0xff]
    %v613 = vld [vmem:[%s9 + $0x50] sm:$0xff]
    %v614 = vld [vmem:[%s9 + $0x58] sm:$0xff]
    %v615 = vld [vmem:[%s9 + $0x60] sm:$0xff]
    %v616 = vld [vmem:[%s9 + $0x68] sm:$0xff]
    %v617 = vld [vmem:[%s9 + $0x70] sm:$0xff]
    %v618 = vld [vmem:[%s9 + $0x78] sm:$0xff]
    %v619 = vld [vmem:[%s9 + $0x80] sm:$0xff]
    %v620 = vld [vmem:[%s9 + $0x88] sm:$0xff]
    %v621 = vld [vmem:[%s9 + $0x90] sm:$0xff]
    %v622 = vld [vmem:[%s9 + $0x98] sm:$0xff]
    %v623 = vld [vmem:[%s9 + $0xa0] sm:$0xff]
    %v624 = vld [vmem:[%s9 + $0xa8] sm:$0xff]
    %v625 = vld [vmem:[%s9 + $0xb0] sm:$0xff]
    %v626 = vld [vmem:[%s9 + $0xb8] sm:$0xff]
    %v627 = vld [vmem:[%s9 + $0xc0] sm:$0xff]
    %v628 = vld [vmem:[%s9 + $0xc8] sm:$0xff]
    %v629 = vld [vmem:[%s9 + $0xd0] sm:$0xff]
    %v630 = vld [vmem:[%s9 + $0xd8] sm:$0xff]
    %v631 = vld [vmem:[%s9 + $0xe0] sm:$0xff]
    %v632 = vld [vmem:[%s9 + $0xe8] sm:$0xff]
    %v633 = vld [vmem:[%s9 + $0xf0] sm:$0xff]
    %v634 = vld [vmem:[%s9 + $0xf8] sm:$0xff]
    %v635 = vld [vmem:[%s9 + $0x100] sm:$0xff]
    %v636 = vld [vmem:[%s9 + $0x108] sm:$0xff]
    %v637 = vld [vmem:[%s9 + $0x110] sm:$0xff]
    %v638 = vld [vmem:[%s9 + $0x118] sm:$0xff]
    %v639 = vld [vmem:[%s9 + $0x120] sm:$0xff]
    %v640 = vld [vmem:[%s9 + $0x128] sm:$0xff]
    %v641 = vld [vmem:[%s9 + $0x130] sm:$0xff]
    %v642 = vld [vmem:[%s9 + $0x138] sm:$0xff]
    %v643 = vld [vmem:[%s9 + $0x140] sm:$0xff]
    %v644 = vld [vmem:[%s9 + $0x148] sm:$0xff]
    %v645 = vld [vmem:[%s9 + $0x150] sm:$0xff]
    %v646 = vld [vmem:[%s9 + $0x158] sm:$0xff]
    %v647 = vld [vmem:[%s9 + $0x160] sm:$0xff]
    %v648 = vld [vmem:[%s9 + $0x168] sm:$0xff]
    %v649 = vld [vmem:[%s9 + $0x170] sm:$0xff]
    %v650 = vld [vmem:[%s9 + $0x178] sm:$0xff]
    %v651 = vld [vmem:[%s10] sm:$0x1]
    %v652 = vld [vmem:[#allocation2 + $0xa] sm:$0xff]
    %v653 = vld [vmem:[#allocation2 + $0x12] sm:$0xff]
    %654 = vst.msk [vmem:[#allocation4] sm:$0xff] %vm361, %v652
    %655 = vst.msk [vmem:[#allocation4 + $0x18] sm:$0xff] %vm361, %v653
    %v656 = vld [vmem:[#allocation2 + $0x2e] sm:$0xff]
    %v657 = vld [vmem:[#allocation2 + $0x36] sm:$0xff]
    %658 = vst.msk [vmem:[#allocation4 + $0x30] sm:$0xff] %vm361, %v656
    %659 = vst.msk [vmem:[#allocation4 + $0x48] sm:$0xff] %vm361, %v657
    %v660 = vld [vmem:[#allocation2 + $0xc] sm:$0xff]
    %v661 = vld [vmem:[#allocation2 + $0x14] sm:$0xff]
    %664 = vrot.lane.b32.xlu0 %v660, 32
    %v665 = vpop.permute.xlu0 %664
    %666 = vrot.lane.b32.xlu0 %v661, 32
    %v667 = vpop.permute.xlu0 %666
    %670 = vst.msk [vmem:[#allocation4] sm:$0xff] %vm384, %v665
    %671 = vst.msk [vmem:[#allocation4 + $0x18] sm:$0xff] %vm384, %v667
    %v672 = vld [vmem:[#allocation2 + $0x30] sm:$0xff]
    %v673 = vld [vmem:[#allocation2 + $0x38] sm:$0xff]
    %676 = vrot.lane.b32.xlu0 %v672, 32
    %v677 = vpop.permute.xlu0 %676
    %678 = vrot.lane.b32.xlu0 %v673, 32
    %v679 = vpop.permute.xlu0 %678
    %682 = vst.msk [vmem:[#allocation4 + $0x30] sm:$0xff] %vm384, %v677
    %683 = vst.msk [vmem:[#allocation4 + $0x48] sm:$0xff] %vm384, %v679
    %v684 = vld [vmem:[#allocation2 + $0xe] sm:$0xff]
    %v685 = vld [vmem:[#allocation2 + $0x16] sm:$0xff]
    %688 = vrot.lane.b32.xlu0 %v684, 64
    %v689 = vpop.permute.xlu0 %688
    %690 = vrot.lane.b32.xlu0 %v685, 64
    %v691 = vpop.permute.xlu0 %690
    %694 = vst.msk [vmem:[#allocation4] sm:$0xff] %vm409, %v689
    %695 = vst.msk [vmem:[#allocation4 + $0x18] sm:$0xff] %vm409, %v691
    %v696 = vld [vmem:[#allocation2 + $0x32] sm:$0xff]
    %v697 = vld [vmem:[#allocation2 + $0x3a] sm:$0xff]
    %700 = vrot.lane.b32.xlu0 %v696, 64
    %v701 = vpop.permute.xlu0 %700
    %702 = vrot.lane.b32.xlu0 %v697, 64
    %v703 = vpop.permute.xlu0 %702
    %706 = vst.msk [vmem:[#allocation4 + $0x30] sm:$0xff] %vm409, %v701
    %707 = vst.msk [vmem:[#allocation4 + $0x48] sm:$0xff] %vm409, %v703
    %v708 = vld [vmem:[#allocation2 + $0x10] sm:$0xff]
    %v709 = vld [vmem:[#allocation2 + $0x18] sm:$0xff]
    %712 = vrot.lane.b32.xlu0 %v708, 96
    %v713 = vpop.permute.xlu0 %712
    %714 = vrot.lane.b32.xlu0 %v709, 96
    %v715 = vpop.permute.xlu0 %714
    %718 = vst.msk [vmem:[#allocation4] sm:$0xff] %vm434, %v713
    %719 = vst.msk [vmem:[#allocation4 + $0x18] sm:$0xff] %vm434, %v715
    %v720 = vld [vmem:[#allocation2 + $0x34] sm:$0xff]
    %v721 = vld [vmem:[#allocation2 + $0x3c] sm:$0xff]
    %724 = vrot.lane.b32.xlu0 %v720, 96
    %v725 = vpop.permute.xlu0 %724
    %726 = vrot.lane.b32.xlu0 %v721, 96
    %v727 = vpop.permute.xlu0 %726
    %730 = vst.msk [vmem:[#allocation4 + $0x30] sm:$0xff] %vm434, %v725
    %731 = vst.msk [vmem:[#allocation4 + $0x48] sm:$0xff] %vm434, %v727
    %v732 = vld [vmem:[#allocation2 + $0x12] sm:$0xff]
    %v733 = vld [vmem:[#allocation2 + $0x1a] sm:$0xff]
    %734 = vst.msk [vmem:[#allocation4 + $0x8] sm:$0xff] %vm361, %v732
    %735 = vst.msk [vmem:[#allocation4 + $0x20] sm:$0xff] %vm361, %v733
    %v736 = vld [vmem:[#allocation2 + $0x36] sm:$0xff]
    %v737 = vld [vmem:[#allocation2 + $0x3e] sm:$0xff]
    %738 = vst.msk [vmem:[#allocation4 + $0x38] sm:$0xff] %vm361, %v736
    %739 = vst.msk [vmem:[#allocation4 + $0x50] sm:$0xff] %vm361, %v737
    %v740 = vld [vmem:[#allocation2 + $0x14] sm:$0xff]
    %v741 = vld [vmem:[#allocation2 + $0x1c] sm:$0xff]
    %744 = vrot.lane.b32.xlu0 %v740, 32
    %v745 = vpop.permute.xlu0 %744
    %746 = vrot.lane.b32.xlu0 %v741, 32
    %v747 = vpop.permute.xlu0 %746
    %750 = vst.msk [vmem:[#allocation4 + $0x8] sm:$0xff] %vm384, %v745
    %751 = vst.msk [vmem:[#allocation4 + $0x20] sm:$0xff] %vm384, %v747
    %v752 = vld [vmem:[#allocation2 + $0x38] sm:$0xff]
    %v753 = vld [vmem:[#allocation2 + $0x40] sm:$0xff]
    %756 = vrot.lane.b32.xlu0 %v752, 32
    %v757 = vpop.permute.xlu0 %756
    %758 = vrot.lane.b32.xlu0 %v753, 32
    %v759 = vpop.permute.xlu0 %758
    %762 = vst.msk [vmem:[#allocation4 + $0x38] sm:$0xff] %vm384, %v757
    %763 = vst.msk [vmem:[#allocation4 + $0x50] sm:$0xff] %vm384, %v759
    %v764 = vld [vmem:[#allocation4] sm:$0xff]
    %v765 = vld [vmem:[#allocation4 + $0x8] sm:$0xff]
    %v766 = vld [vmem:[#allocation4 + $0x18] sm:$0xff]
    %v767 = vld [vmem:[#allocation4 + $0x20] sm:$0xff]
    %v768 = vld [vmem:[#allocation4 + $0x30] sm:$0xff]
    %v769 = vld [vmem:[#allocation4 + $0x38] sm:$0xff]
    %v770 = vld [vmem:[#allocation4 + $0x48] sm:$0xff]
    %v771 = vld [vmem:[#allocation4 + $0x50] sm:$0xff]
    %v773 = vperm.slane %v602, 0
    %v776 = vsel %vm63, %v765, 0
    %v779 = vsel %vm63, %v767, 0
    %v782 = vsel %vm63, %v769, 0
    %v785 = vsel %vm63, %v771, 0
    %787 = vmatpush.msra.mxu0 %v593
    %788 = vmatpush.msra.mxu0 %v592
    %789 = vmatpush.msra.mxu0 %v591
    %790 = vmatpush.msra.mxu0 %v590
    %791 = vmatpush.msra.mxu0 %v589
    %792 = vmatpush.msra.mxu0 %v588
    %793 = vmatpush.msra.mxu0 %v587
    %794 = vmatpush.msra.mxu0 %v586
    %795 = vmatpush.msra.mxu0 %v585
    %796 = vmatpush.msra.mxu0 %v584
    %797 = vmatpush.msra.mxu0 %v583
    %798 = vmatpush.msra.mxu0 %v582
    %799 = vmatpush.msra.mxu0 %v581
    %800 = vmatpush.msra.mxu0 %v580
    %801 = vmatpush.msra.mxu0 %v579
    %802 = vmatpush.msra.mxu0 %v578
    %803 = vmatmul.f32.gmra.mxu0 %v764
    %v804 = vpop.f32.mrf.mxu0
    %v805 = vadd.f32 %v773, %v804
    %806 = vmatmul.f32.gmra.mxu0 %v766
    %v807 = vpop.f32.mrf.mxu0
    %v808 = vadd.f32 %v773, %v807
    %809 = vmatmul.f32.gmra.mxu0 %v768
    %v810 = vpop.f32.mrf.mxu0
    %v811 = vadd.f32 %v773, %v810
    %812 = vmatmul.f32.gmra.mxu0 %v770
    %v813 = vpop.f32.mrf.mxu0
    %v814 = vadd.f32 %v773, %v813
    %815 = vdwg.mxu0
    %816 = vmatpush.msra.mxu0 0.0
    %817 = vmatpush.msra.mxu0 0.0
    %818 = vmatpush.msra.mxu0 0.0
    %819 = vmatpush.msra.mxu0 0.0
    %820 = vmatpush.msra.mxu0 0.0
    %821 = vmatpush.msra.mxu0 0.0
    %822 = vmatpush.msra.mxu0 0.0
    %823 = vmatpush.msra.mxu0 0.0
    %824 = vmatpush.msra.mxu0 %v601
    %825 = vmatpush.msra.mxu0 %v600
    %826 = vmatpush.msra.mxu0 %v599
    %827 = vmatpush.msra.mxu0 %v598
    %828 = vmatpush.msra.mxu0 %v597
    %829 = vmatpush.msra.mxu0 %v596
    %830 = vmatpush.msra.mxu0 %v595
    %831 = vmatpush.msra.mxu0 %v594
    %832 = vmatmul.f32.gmra.mxu0 %v776
    %v833 = vpop.f32.mrf.mxu0
    %v834 = vadd.f32 %v805, %v833
    %835 = vmatmul.f32.gmra.mxu0 %v779
    %v836 = vpop.f32.mrf.mxu0
    %v837 = vadd.f32 %v808, %v836
    %838 = vmatmul.f32.gmra.mxu0 %v782
    %v839 = vpop.f32.mrf.mxu0
    %v840 = vadd.f32 %v811, %v839
    %841 = vmatmul.f32.gmra.mxu0 %v785
    %v842 = vpop.f32.mrf.mxu0
    %v843 = vadd.f32 %v814, %v842
    %844 = vdwg.mxu0
    %v845 = vmax.f32 %v834, 0.0
    %v846 = vmax.f32 %v837, 0.0
    %v847 = vmax.f32 %v840, 0.0
    %v848 = vmax.f32 %v843, 0.0
    %v849 = vld [vmem:[%s11] sm:$0xff]
    %v850 = vld [vmem:[%s11 + $0x8] sm:$0xff]
    %v851 = vld [vmem:[%s11 + $0x10] sm:$0xff]
    %v852 = vld [vmem:[%s11 + $0x18] sm:$0xff]
    %v853 = vld [vmem:[%s12] sm:$0x1]
    %v855 = vperm.slane %v853, 0
    %857 = vrot.lane.b32.xlu0 %v765, 96
    %v858 = vpop.permute.xlu0 %857
    %859 = vrot.lane.b32.xlu0 %v767, 96
    %v860 = vpop.permute.xlu0 %859
    %861 = vrot.lane.b32.xlu0 %v769, 96
    %v862 = vpop.permute.xlu0 %861
    %863 = vrot.lane.b32.xlu0 %v771, 96
    %v864 = vpop.permute.xlu0 %863
    %v865 = vsel %vm361, %v858, 0
    %v867 = vsel %vm361, %v860, 0
    %v869 = vsel %vm361, %v862, 0
    %v871 = vsel %vm361, %v864, 0
    %873 = vmatpush.msra.mxu0 0.0
    %874 = vmatpush.msra.mxu0 0.0
    %875 = vmatpush.msra.mxu0 0.0
    %876 = vmatpush.msra.mxu0 0.0
    %877 = vmatpush.msra.mxu0 0.0
    %878 = vmatpush.msra.mxu0 0.0
    %879 = vmatpush.msra.mxu0 0.0
    %880 = vmatpush.msra.mxu0 0.0
    %881 = vmatpush.msra.mxu0 0.0
    %882 = vmatpush.msra.mxu0 0.0
    %883 = vmatpush.msra.mxu0 0.0
    %884 = vmatpush.msra.mxu0 0.0
    %885 = vmatpush.msra.mxu0 %v852
    %886 = vmatpush.msra.mxu0 %v851
    %887 = vmatpush.msra.mxu0 %v850
    %888 = vmatpush.msra.mxu0 %v849
    %889 = vmatmul.f32.gmra.mxu0 %v865
    %v890 = vpop.f32.mrf.mxu0
    %v891 = vadd.f32 %v855, %v890
    %892 = vmatmul.f32.gmra.mxu0 %v867
    %v893 = vpop.f32.mrf.mxu0
    %v894 = vadd.f32 %v855, %v893
    %895 = vmatmul.f32.gmra.mxu0 %v869
    %v896 = vpop.f32.mrf.mxu0
    %v897 = vadd.f32 %v855, %v896
    %898 = vmatmul.f32.gmra.mxu0 %v871
    %v899 = vpop.f32.mrf.mxu0
    %v900 = vadd.f32 %v855, %v899
    %901 = vdwg.mxu0
    %902 = vst.msk [vmem:[#allocation3 + $0x14] sm:$0xff] %vm63, %v845
    %903 = vst.msk [vmem:[#allocation3 + $0x1c] sm:$0xff] %vm63, %v846
    %904 = vst.msk [vmem:[#allocation3 + $0x38] sm:$0xff] %vm63, %v847
    %905 = vst.msk [vmem:[#allocation3 + $0x40] sm:$0xff] %vm63, %v848
    %v906 = vld [vmem:[#allocation3 + $0xa] sm:$0xff]
    %v907 = vld [vmem:[#allocation3 + $0x12] sm:$0xff]
    %908 = vst.msk [vmem:[#allocation4] sm:$0xff] %vm63, %v906
    %909 = vst.msk [vmem:[#allocation4 + $0x18] sm:$0xff] %vm63, %v907
    %v910 = vld [vmem:[#allocation3 + $0x2e] sm:$0xff]
    %v911 = vld [vmem:[#allocation3 + $0x36] sm:$0xff]
    %912 = vst.msk [vmem:[#allocation4 + $0x30] sm:$0xff] %vm63, %v910
    %913 = vst.msk [vmem:[#allocation4 + $0x48] sm:$0xff] %vm63, %v911
    %v914 = vld [vmem:[#allocation3 + $0xc] sm:$0xff]
    %v915 = vld [vmem:[#allocation3 + $0x14] sm:$0xff]
    %918 = vrot.lane.b32.xlu0 %v914, 64
    %v919 = vpop.permute.xlu0 %918
    %920 = vrot.lane.b32.xlu0 %v915, 64
    %v921 = vpop.permute.xlu0 %920
    %vm924 = vcmask 1048064
    %925 = vst.msk [vmem:[#allocation4] sm:$0xff] %vm924, %v919
    %926 = vst.msk [vmem:[#allocation4 + $0x18] sm:$0xff] %vm924, %v921
    %v927 = vld [vmem:[#allocation3 + $0x30] sm:$0xff]
    %v928 = vld [vmem:[#allocation3 + $0x38] sm:$0xff]
    %931 = vrot.lane.b32.xlu0 %v927, 64
    %v932 = vpop.permute.xlu0 %931
    %933 = vrot.lane.b32.xlu0 %v928, 64
    %v934 = vpop.permute.xlu0 %933
    %937 = vst.msk [vmem:[#allocation4 + $0x30] sm:$0xff] %vm924, %v932
    %938 = vst.msk [vmem:[#allocation4 + $0x48] sm:$0xff] %vm924, %v934
    %v939 = vld [vmem:[#allocation3 + $0xe] sm:$0xff]
    %v940 = vld [vmem:[#allocation3 + $0x16] sm:$0xff]
    %941 = vst.msk [vmem:[#allocation4 + $0x8] sm:$0xff] %vm63, %v939
    %942 = vst.msk [vmem:[#allocation4 + $0x20] sm:$0xff] %vm63, %v940
    %v943 = vld [vmem:[#allocation3 + $0x32] sm:$0xff]
    %v944 = vld [vmem:[#allocation3 + $0x3a] sm:$0xff]
    %945 = vst.msk [vmem:[#allocation4 + $0x38] sm:$0xff] %vm63, %v943
    %946 = vst.msk [vmem:[#allocation4 + $0x50] sm:$0xff] %vm63, %v944
    %v947 = vld [vmem:[#allocation3 + $0x10] sm:$0xff]
    %v948 = vld [vmem:[#allocation3 + $0x18] sm:$0xff]
    %951 = vrot.lane.b32.xlu0 %v947, 64
    %v952 = vpop.permute.xlu0 %951
    %953 = vrot.lane.b32.xlu0 %v948, 64
    %v954 = vpop.permute.xlu0 %953
    %957 = vst.msk [vmem:[#allocation4 + $0x8] sm:$0xff] %vm924, %v952
    %958 = vst.msk [vmem:[#allocation4 + $0x20] sm:$0xff] %vm924, %v954
    %v959 = vld [vmem:[#allocation3 + $0x34] sm:$0xff]
    %v960 = vld [vmem:[#allocation3 + $0x3c] sm:$0xff]
    %963 = vrot.lane.b32.xlu0 %v959, 64
    %v964 = vpop.permute.xlu0 %963
    %965 = vrot.lane.b32.xlu0 %v960, 64
    %v966 = vpop.permute.xlu0 %965
    %969 = vst.msk [vmem:[#allocation4 + $0x38] sm:$0xff] %vm924, %v964
    %970 = vst.msk [vmem:[#allocation4 + $0x50] sm:$0xff] %vm924, %v966
    %v971 = vld [vmem:[#allocation3 + $0x12] sm:$0xff]
    %v972 = vld [vmem:[#allocation3 + $0x1a] sm:$0xff]
    %973 = vst.msk [vmem:[#allocation4 + $0x10] sm:$0xff] %vm63, %v971
    %974 = vst.msk [vmem:[#allocation4 + $0x28] sm:$0xff] %vm63, %v972
    %v975 = vld [vmem:[#allocation3 + $0x36] sm:$0xff]
    %v976 = vld [vmem:[#allocation3 + $0x3e] sm:$0xff]
    %977 = vst.msk [vmem:[#allocation4 + $0x40] sm:$0xff] %vm63, %v975
    %978 = vst.msk [vmem:[#allocation4 + $0x58] sm:$0xff] %vm63, %v976
    %v979 = vld [vmem:[#allocation3 + $0x14] sm:$0xff]
    %v980 = vld [vmem:[#allocation3 + $0x1c] sm:$0xff]
    %983 = vrot.lane.b32.xlu0 %v979, 64
    %v984 = vpop.permute.xlu0 %983
    %985 = vrot.lane.b32.xlu0 %v980, 64
    %v986 = vpop.permute.xlu0 %985
    %989 = vst.msk [vmem:[#allocation4 + $0x10] sm:$0xff] %vm924, %v984
    %990 = vst.msk [vmem:[#allocation4 + $0x28] sm:$0xff] %vm924, %v986
    %v991 = vld [vmem:[#allocation3 + $0x38] sm:$0xff]
    %v992 = vld [vmem:[#allocation3 + $0x40] sm:$0xff]
    %995 = vrot.lane.b32.xlu0 %v991, 64
    %v996 = vpop.permute.xlu0 %995
    %997 = vrot.lane.b32.xlu0 %v992, 64
    %v998 = vpop.permute.xlu0 %997
    %1001 = vst.msk [vmem:[#allocation4 + $0x40] sm:$0xff] %vm924, %v996
    %1002 = vst.msk [vmem:[#allocation4 + $0x58] sm:$0xff] %vm924, %v998
    %v1003 = vld [vmem:[#allocation4] sm:$0xff]
    %v1004 = vld [vmem:[#allocation4 + $0x8] sm:$0xff]
    %v1005 = vld [vmem:[#allocation4 + $0x10] sm:$0xff]
    %v1006 = vld [vmem:[#allocation4 + $0x18] sm:$0xff]
    %v1007 = vld [vmem:[#allocation4 + $0x20] sm:$0xff]
    %v1008 = vld [vmem:[#allocation4 + $0x28] sm:$0xff]
    %v1009 = vld [vmem:[#allocation4 + $0x30] sm:$0xff]
    %v1010 = vld [vmem:[#allocation4 + $0x38] sm:$0xff]
    %v1011 = vld [vmem:[#allocation4 + $0x40] sm:$0xff]
    %v1012 = vld [vmem:[#allocation4 + $0x48] sm:$0xff]
    %v1013 = vld [vmem:[#allocation4 + $0x50] sm:$0xff]
    %v1014 = vld [vmem:[#allocation4 + $0x58] sm:$0xff]
    %v1016 = vperm.slane %v651, 0
    %1018 = vmatpush.msra.mxu0 %v618
    %1019 = vmatpush.msra.mxu0 %v617
    %1020 = vmatpush.msra.mxu0 %v616
    %1021 = vmatpush.msra.mxu0 %v615
    %1022 = vmatpush.msra.mxu0 %v614
    %1023 = vmatpush.msra.mxu0 %v613
    %1024 = vmatpush.msra.mxu0 %v612
    %1025 = vmatpush.msra.mxu0 %v611
    %1026 = vmatpush.msra.mxu0 %v610
    %1027 = vmatpush.msra.mxu0 %v609
    %1028 = vmatpush.msra.mxu0 %v608
    %1029 = vmatpush.msra.mxu0 %v607
    %1030 = vmatpush.msra.mxu0 %v606
    %1031 = vmatpush.msra.mxu0 %v605
    %1032 = vmatpush.msra.mxu0 %v604
    %1033 = vmatpush.msra.mxu0 %v603
    %1034 = vmatmul.f32.gmra.mxu0 %v1003
    %v1035 = vpop.f32.mrf.mxu0
    %v1036 = vadd.f32 %v1016, %v1035
    %1037 = vmatmul.f32.gmra.mxu0 %v1006
    %v1038 = vpop.f32.mrf.mxu0
    %v1039 = vadd.f32 %v1016, %v1038
    %1040 = vmatmul.f32.gmra.mxu0 %v1009
    %v1041 = vpop.f32.mrf.mxu0
    %v1042 = vadd.f32 %v1016, %v1041
    %1043 = vmatmul.f32.gmra.mxu0 %v1012
    %v1044 = vpop.f32.mrf.mxu0
    %v1045 = vadd.f32 %v1016, %v1044
    %1046 = vdwg.mxu0
    %1047 = vmatpush.msra.mxu0 %v634
    %1048 = vmatpush.msra.mxu0 %v633
    %1049 = vmatpush.msra.mxu0 %v632
    %1050 = vmatpush.msra.mxu0 %v631
    %1051 = vmatpush.msra.mxu0 %v630
    %1052 = vmatpush.msra.mxu0 %v629
    %1053 = vmatpush.msra.mxu0 %v628
    %1054 = vmatpush.msra.mxu0 %v627
    %1055 = vmatpush.msra.mxu0 %v626
    %1056 = vmatpush.msra.mxu0 %v625
    %1057 = vmatpush.msra.mxu0 %v624
    %1058 = vmatpush.msra.mxu0 %v623
    %1059 = vmatpush.msra.mxu0 %v622
    %1060 = vmatpush.msra.mxu0 %v621
    %1061 = vmatpush.msra.mxu0 %v620
    %1062 = vmatpush.msra.mxu0 %v619
    %1063 = vmatmul.f32.gmra.mxu0 %v1004
    %v1064 = vpop.f32.mrf.mxu0
    %v1065 = vadd.f32 %v1036, %v1064
    %1066 = vmatmul.f32.gmra.mxu0 %v1007
    %v1067 = vpop.f32.mrf.mxu0
    %v1068 = vadd.f32 %v1039, %v1067
    %1069 = vmatmul.f32.gmra.mxu0 %v1010
    %v1070 = vpop.f32.mrf.mxu0
    %v1071 = vadd.f32 %v1042, %v1070
    %1072 = vmatmul.f32.gmra.mxu0 %v1013
    %v1073 = vpop.f32.mrf.mxu0
    %v1074 = vadd.f32 %v1045, %v1073
    %1075 = vdwg.mxu0
    %1076 = vmatpush.msra.mxu0 %v650
    %1077 = vmatpush.msra.mxu0 %v649
    %1078 = vmatpush.msra.mxu0 %v648
    %1079 = vmatpush.msra.mxu0 %v647
    %1080 = vmatpush.msra.mxu0 %v646
    %1081 = vmatpush.msra.mxu0 %v645
    %1082 = vmatpush.msra.mxu0 %v644
    %1083 = vmatpush.msra.mxu0 %v643
    %1084 = vmatpush.msra.mxu0 %v642
    %1085 = vmatpush.msra.mxu0 %v641
    %1086 = vmatpush.msra.mxu0 %v640
    %1087 = vmatpush.msra.mxu0 %v639
    %1088 = vmatpush.msra.mxu0 %v638
    %1089 = vmatpush.msra.mxu0 %v637
    %1090 = vmatpush.msra.mxu0 %v636
    %1091 = vmatpush.msra.mxu0 %v635
    %1092 = vmatmul.f32.gmra.mxu0 %v1005
    %v1093 = vpop.f32.mrf.mxu0
    %v1094 = vadd.f32 %v1065, %v1093
    %1095 = vmatmul.f32.gmra.mxu0 %v1008
    %v1096 = vpop.f32.mrf.mxu0
    %v1097 = vadd.f32 %v1068, %v1096
    %1098 = vmatmul.f32.gmra.mxu0 %v1011
    %v1099 = vpop.f32.mrf.mxu0
    %v1100 = vadd.f32 %v1071, %v1099
    %1101 = vmatmul.f32.gmra.mxu0 %v1014
    %v1102 = vpop.f32.mrf.mxu0
    %v1103 = vadd.f32 %v1074, %v1102
    %1104 = vdwg.mxu0
    %v1105 = vmax.f32 %v1094, 0.0
    %v1106 = vmax.f32 %v1097, 0.0
    %v1107 = vmax.f32 %v1100, 0.0
    %v1108 = vmax.f32 %v1103, 0.0
    %v1109 = vadd.f32 %v1105, %v891
    %v1110 = vadd.f32 %v1106, %v894
    %v1111 = vadd.f32 %v1107, %v897
    %v1112 = vadd.f32 %v1108, %v900
    %v1113 = vmax.f32 %v1109, 0.0
    %v1114 = vmax.f32 %v1110, 0.0
    %v1115 = vmax.f32 %v1111, 0.0
    %v1116 = vmax.f32 %v1112, 0.0
    %1117 = vst.msk [vmem:[#allocation2 + $0x14] sm:$0xff] %vm63, %v1113
    %1118 = vst.msk [vmem:[#allocation2 + $0x1c] sm:$0xff] %vm63, %v1114
    %1119 = vst.msk [vmem:[#allocation2 + $0x38] sm:$0xff] %vm63, %v1115
    %1120 = vst.msk [vmem:[#allocation2 + $0x40] sm:$0xff] %vm63, %v1116
    %v1121 = vld [vmem:[%s13] sm:$0xff]
    %v1122 = vld [vmem:[%s13 + $0x8] sm:$0xff]
    %v1123 = vld [vmem:[%s13 + $0x10] sm:$0xff]
    %v1124 = vld [vmem:[%s13 + $0x18] sm:$0xff]
    %v1125 = vld [vmem:[%s13 + $0x20] sm:$0xff]
    %v1126 = vld [vmem:[%s13 + $0x28] sm:$0xff]
    %v1127 = vld [vmem:[%s13 + $0x30] sm:$0xff]
    %v1128 = vld [vmem:[%s13 + $0x38] sm:$0xff]
    %v1129 = vld [vmem:[%s13 + $0x40] sm:$0xff]
    %v1130 = vld [vmem:[%s13 + $0x48] sm:$0xff]
    %v1131 = vld [vmem:[%s13 + $0x50] sm:$0xff]
    %v1132 = vld [vmem:[%s13 + $0x58] sm:$0xff]
    %v1133 = vld [vmem:[%s13 + $0x60] sm:$0xff]
    %v1134 = vld [vmem:[%s13 + $0x68] sm:$0xff]
    %v1135 = vld [vmem:[%s13 + $0x70] sm:$0xff]
    %v1136 = vld [vmem:[%s13 + $0x78] sm:$0xff]
    %v1137 = vld [vmem:[%s13 + $0x80] sm:$0xff]
    %v1138 = vld [vmem:[%s13 + $0x88] sm:$0xff]
    %v1139 = vld [vmem:[%s13 + $0x90] sm:$0xff]
    %v1140 = vld [vmem:[%s13 + $0x98] sm:$0xff]
    %v1141 = vld [vmem:[%s13 + $0xa0] sm:$0xff]
    %v1142 = vld [vmem:[%s13 + $0xa8] sm:$0xff]
    %v1143 = vld [vmem:[%s13 + $0xb0] sm:$0xff]
    %v1144 = vld [vmem:[%s13 + $0xb8] sm:$0xff]
    %v1145 = vld [vmem:[%s13 + $0xc0] sm:$0xff]
    %v1146 = vld [vmem:[%s13 + $0xc8] sm:$0xff]
    %v1147 = vld [vmem:[%s13 + $0xd0] sm:$0xff]
    %v1148 = vld [vmem:[%s13 + $0xd8] sm:$0xff]
    %v1149 = vld [vmem:[%s13 + $0xe0] sm:$0xff]
    %v1150 = vld [vmem:[%s13 + $0xe8] sm:$0xff]
    %v1151 = vld [vmem:[%s13 + $0xf0] sm:$0xff]
    %v1152 = vld [vmem:[%s13 + $0xf8] sm:$0xff]
    %v1153 = vld [vmem:[%s13 + $0x100] sm:$0xff]
    %v1154 = vld [vmem:[%s13 + $0x108] sm:$0xff]
    %v1155 = vld [vmem:[%s13 + $0x110] sm:$0xff]
    %v1156 = vld [vmem:[%s13 + $0x118] sm:$0xff]
    %v1157 = vld [vmem:[%s13 + $0x120] sm:$0xff]
    %v1158 = vld [vmem:[%s13 + $0x128] sm:$0xff]
    %v1159 = vld [vmem:[%s13 + $0x130] sm:$0xff]
    %v1160 = vld [vmem:[%s13 + $0x138] sm:$0xff]
    %v1161 = vld [vmem:[%s13 + $0x140] sm:$0xff]
    %v1162 = vld [vmem:[%s13 + $0x148] sm:$0xff]
    %v1163 = vld [vmem:[%s13 + $0x150] sm:$0xff]
    %v1164 = vld [vmem:[%s13 + $0x158] sm:$0xff]
    %v1165 = vld [vmem:[%s13 + $0x160] sm:$0xff]
    %v1166 = vld [vmem:[%s13 + $0x168] sm:$0xff]
    %v1167 = vld [vmem:[%s13 + $0x170] sm:$0xff]
    %v1168 = vld [vmem:[%s13 + $0x178] sm:$0xff]
    %v1169 = vld [vmem:[%s14] sm:$0x1]
    %v1170 = vld [vmem:[%s15] sm:$0xff]
    %v1171 = vld [vmem:[%s15 + $0x8] sm:$0xff]
    %v1172 = vld [vmem:[%s15 + $0x10] sm:$0xff]
    %v1173 = vld [vmem:[%s15 + $0x18] sm:$0xff]
    %v1174 = vld [vmem:[%s15 + $0x20] sm:$0xff]
    %v1175 = vld [vmem:[%s15 + $0x28] sm:$0xff]
    %v1176 = vld [vmem:[%s15 + $0x30] sm:$0xff]
    %v1177 = vld [vmem:[%s15 + $0x38] sm:$0xff]
    %v1178 = vld [vmem:[%s15 + $0x40] sm:$0xff]
    %v1179 = vld [vmem:[%s15 + $0x48] sm:$0xff]
    %v1180 = vld [vmem:[%s15 + $0x50] sm:$0xff]
    %v1181 = vld [vmem:[%s15 + $0x58] sm:$0xff]
    %v1182 = vld [vmem:[%s15 + $0x60] sm:$0xff]
    %v1183 = vld [vmem:[%s15 + $0x68] sm:$0xff]
    %v1184 = vld [vmem:[%s15 + $0x70] sm:$0xff]
    %v1185 = vld [vmem:[%s15 + $0x78] sm:$0xff]
    %v1186 = vld [vmem:[%s15 + $0x80] sm:$0xff]
    %v1187 = vld [vmem:[%s15 + $0x88] sm:$0xff]
    %v1188 = vld [vmem:[%s15 + $0x90] sm:$0xff]
    %v1189 = vld [vmem:[%s15 + $0x98] sm:$0xff]
    %v1190 = vld [vmem:[%s15 + $0xa0] sm:$0xff]
    %v1191 = vld [vmem:[%s15 + $0xa8] sm:$0xff]
    %v1192 = vld [vmem:[%s15 + $0xb0] sm:$0xff]
    %v1193 = vld [vmem:[%s15 + $0xb8] sm:$0xff]
    %v1194 = vld [vmem:[%s15 + $0xc0] sm:$0xff]
    %v1195 = vld [vmem:[%s15 + $0xc8] sm:$0xff]
    %v1196 = vld [vmem:[%s15 + $0xd0] sm:$0xff]
    %v1197 = vld [vmem:[%s15 + $0xd8] sm:$0xff]
    %v1198 = vld [vmem:[%s15 + $0xe0] sm:$0xff]
    %v1199 = vld [vmem:[%s15 + $0xe8] sm:$0xff]
    %v1200 = vld [vmem:[%s15 + $0xf0] sm:$0xff]
    %v1201 = vld [vmem:[%s15 + $0xf8] sm:$0xff]
    %v1202 = vld [vmem:[%s15 + $0x100] sm:$0xff]
    %v1203 = vld [vmem:[%s15 + $0x108] sm:$0xff]
    %v1204 = vld [vmem:[%s15 + $0x110] sm:$0xff]
    %v1205 = vld [vmem:[%s15 + $0x118] sm:$0xff]
    %v1206 = vld [vmem:[%s15 + $0x120] sm:$0xff]
    %v1207 = vld [vmem:[%s15 + $0x128] sm:$0xff]
    %v1208 = vld [vmem:[%s15 + $0x130] sm:$0xff]
    %v1209 = vld [vmem:[%s15 + $0x138] sm:$0xff]
    %v1210 = vld [vmem:[%s15 + $0x140] sm:$0xff]
    %v1211 = vld [vmem:[%s15 + $0x148] sm:$0xff]
    %v1212 = vld [vmem:[%s15 + $0x150] sm:$0xff]
    %v1213 = vld [vmem:[%s15 + $0x158] sm:$0xff]
    %v1214 = vld [vmem:[%s15 + $0x160] sm:$0xff]
    %v1215 = vld [vmem:[%s15 + $0x168] sm:$0xff]
    %v1216 = vld [vmem:[%s15 + $0x170] sm:$0xff]
    %v1217 = vld [vmem:[%s15 + $0x178] sm:$0xff]
    %v1218 = vld [vmem:[%s16] sm:$0x1]
    %v1219 = vld [vmem:[#allocation2] sm:$0xff]
    %v1220 = vld [vmem:[#allocation2 + $0x8] sm:$0xff]
    %1221 = vst.msk [vmem:[#allocation4] sm:$0xff] %vm63, %v1219
    %1222 = vst.msk [vmem:[#allocation4 + $0x18] sm:$0xff] %vm63, %v1220
    %v1223 = vld [vmem:[#allocation2 + $0x24] sm:$0xff]
    %v1224 = vld [vmem:[#allocation2 + $0x2c] sm:$0xff]
    %1225 = vst.msk [vmem:[#allocation4 + $0x30] sm:$0xff] %vm63, %v1223
    %1226 = vst.msk [vmem:[#allocation4 + $0x48] sm:$0xff] %vm63, %v1224
    %v1227 = vld [vmem:[#allocation2 + $0x4] sm:$0xff]
    %v1228 = vld [vmem:[#allocation2 + $0xc] sm:$0xff]
    %1231 = vrot.lane.b32.xlu0 %v1227, 64
    %v1232 = vpop.permute.xlu0 %1231
    %1233 = vrot.lane.b32.xlu0 %v1228, 64
    %v1234 = vpop.permute.xlu0 %1233
    %1237 = vst.msk [vmem:[#allocation4] sm:$0xff] %vm924, %v1232
    %1238 = vst.msk [vmem:[#allocation4 + $0x18] sm:$0xff] %vm924, %v1234
    %v1239 = vld [vmem:[#allocation2 + $0x28] sm:$0xff]
    %v1240 = vld [vmem:[#allocation2 + $0x30] sm:$0xff]
    %1243 = vrot.lane.b32.xlu0 %v1239, 64
    %v1244 = vpop.permute.xlu0 %1243
    %1245 = vrot.lane.b32.xlu0 %v1240, 64
    %v1246 = vpop.permute.xlu0 %1245
    %1249 = vst.msk [vmem:[#allocation4 + $0x30] sm:$0xff] %vm924, %v1244
    %1250 = vst.msk [vmem:[#allocation4 + $0x48] sm:$0xff] %vm924, %v1246
    %v1251 = vld [vmem:[#allocation2 + $0x8] sm:$0xff]
    %v1252 = vld [vmem:[#allocation2 + $0x10] sm:$0xff]
    %1253 = vst.msk [vmem:[#allocation4 + $0x8] sm:$0xff] %vm63, %v1251
    %1254 = vst.msk [vmem:[#allocation4 + $0x20] sm:$0xff] %vm63, %v1252
    %v1255 = vld [vmem:[#allocation2 + $0x2c] sm:$0xff]
    %v1256 = vld [vmem:[#allocation2 + $0x34] sm:$0xff]
    %1257 = vst.msk [vmem:[#allocation4 + $0x38] sm:$0xff] %vm63, %v1255
    %1258 = vst.msk [vmem:[#allocation4 + $0x50] sm:$0xff] %vm63, %v1256
    %v1259 = vld [vmem:[#allocation2 + $0xc] sm:$0xff]
    %v1260 = vld [vmem:[#allocation2 + $0x14] sm:$0xff]
    %1263 = vrot.lane.b32.xlu0 %v1259, 64
    %v1264 = vpop.permute.xlu0 %1263
    %1265 = vrot.lane.b32.xlu0 %v1260, 64
    %v1266 = vpop.permute.xlu0 %1265
    %1269 = vst.msk [vmem:[#allocation4 + $0x8] sm:$0xff] %vm924, %v1264
    %1270 = vst.msk [vmem:[#allocation4 + $0x20] sm:$0xff] %vm924, %v1266
    %v1271 = vld [vmem:[#allocation2 + $0x30] sm:$0xff]
    %v1272 = vld [vmem:[#allocation2 + $0x38] sm:$0xff]
    %1275 = vrot.lane.b32.xlu0 %v1271, 64
    %v1276 = vpop.permute.xlu0 %1275
    %1277 = vrot.lane.b32.xlu0 %v1272, 64
    %v1278 = vpop.permute.xlu0 %1277
    %1281 = vst.msk [vmem:[#allocation4 + $0x38] sm:$0xff] %vm924, %v1276
    %1282 = vst.msk [vmem:[#allocation4 + $0x50] sm:$0xff] %vm924, %v1278
    %v1283 = vld [vmem:[#allocation2 + $0x10] sm:$0xff]
    %v1284 = vld [vmem:[#allocation2 + $0x18] sm:$0xff]
    %1285 = vst.msk [vmem:[#allocation4 + $0x10] sm:$0xff] %vm63, %v1283
    %1286 = vst.msk [vmem:[#allocation4 + $0x28] sm:$0xff] %vm63, %v1284
    %v1287 = vld [vmem:[#allocation2 + $0x34] sm:$0xff]
    %v1288 = vld [vmem:[#allocation2 + $0x3c] sm:$0xff]
    %1289 = vst.msk [vmem:[#allocation4 + $0x40] sm:$0xff] %vm63, %v1287
    %1290 = vst.msk [vmem:[#allocation4 + $0x58] sm:$0xff] %vm63, %v1288
    %v1291 = vld [vmem:[#allocation2 + $0x14] sm:$0xff]
    %v1292 = vld [vmem:[#allocation2 + $0x1c] sm:$0xff]
    %1295 = vrot.lane.b32.xlu0 %v1291, 64
    %v1296 = vpop.permute.xlu0 %1295
    %1297 = vrot.lane.b32.xlu0 %v1292, 64
    %v1298 = vpop.permute.xlu0 %1297
    %1301 = vst.msk [vmem:[#allocation4 + $0x10] sm:$0xff] %vm924, %v1296
    %1302 = vst.msk [vmem:[#allocation4 + $0x28] sm:$0xff] %vm924, %v1298
    %v1303 = vld [vmem:[#allocation2 + $0x38] sm:$0xff]
    %v1304 = vld [vmem:[#allocation2 + $0x40] sm:$0xff]
    %1307 = vrot.lane.b32.xlu0 %v1303, 64
    %v1308 = vpop.permute.xlu0 %1307
    %1309 = vrot.lane.b32.xlu0 %v1304, 64
    %v1310 = vpop.permute.xlu0 %1309
    %1313 = vst.msk [vmem:[#allocation4 + $0x40] sm:$0xff] %vm924, %v1308
    %1314 = vst.msk [vmem:[#allocation4 + $0x58] sm:$0xff] %vm924, %v1310
    %v1315 = vld [vmem:[#allocation4] sm:$0xff]
    %v1316 = vld [vmem:[#allocation4 + $0x8] sm:$0xff]
    %v1317 = vld [vmem:[#allocation4 + $0x10] sm:$0xff]
    %v1318 = vld [vmem:[#allocation4 + $0x18] sm:$0xff]
    %v1319 = vld [vmem:[#allocation4 + $0x20] sm:$0xff]
    %v1320 = vld [vmem:[#allocation4 + $0x28] sm:$0xff]
    %v1321 = vld [vmem:[#allocation4 + $0x30] sm:$0xff]
    %v1322 = vld [vmem:[#allocation4 + $0x38] sm:$0xff]
    %v1323 = vld [vmem:[#allocation4 + $0x40] sm:$0xff]
    %v1324 = vld [vmem:[#allocation4 + $0x48] sm:$0xff]
    %v1325 = vld [vmem:[#allocation4 + $0x50] sm:$0xff]
    %v1326 = vld [vmem:[#allocation4 + $0x58] sm:$0xff]
    %v1328 = vperm.slane %v1169, 0
    %1330 = vmatpush.msra.mxu0 %v1136
    %1331 = vmatpush.msra.mxu0 %v1135
    %1332 = vmatpush.msra.mxu0 %v1134
    %1333 = vmatpush.msra.mxu0 %v1133
    %1334 = vmatpush.msra.mxu0 %v1132
    %1335 = vmatpush.msra.mxu0 %v1131
    %1336 = vmatpush.msra.mxu0 %v1130
    %1337 = vmatpush.msra.mxu0 %v1129
    %1338 = vmatpush.msra.mxu0 %v1128
    %1339 = vmatpush.msra.mxu0 %v1127
    %1340 = vmatpush.msra.mxu0 %v1126
    %1341 = vmatpush.msra.mxu0 %v1125
    %1342 = vmatpush.msra.mxu0 %v1124
    %1343 = vmatpush.msra.mxu0 %v1123
    %1344 = vmatpush.msra.mxu0 %v1122
    %1345 = vmatpush.msra.mxu0 %v1121
    %1346 = vmatmul.f32.gmra.mxu0 %v1315
    %v1347 = vpop.f32.mrf.mxu0
    %v1348 = vadd.f32 %v1328, %v1347
    %1349 = vmatmul.f32.gmra.mxu0 %v1318
    %v1350 = vpop.f32.mrf.mxu0
    %v1351 = vadd.f32 %v1328, %v1350
    %1352 = vmatmul.f32.gmra.mxu0 %v1321
    %v1353 = vpop.f32.mrf.mxu0
    %v1354 = vadd.f32 %v1328, %v1353
    %1355 = vmatmul.f32.gmra.mxu0 %v1324
    %v1356 = vpop.f32.mrf.mxu0
    %v1357 = vadd.f32 %v1328, %v1356
    %1358 = vdwg.mxu0
    %1359 = vmatpush.msra.mxu0 %v1152
    %1360 = vmatpush.msra.mxu0 %v1151
    %1361 = vmatpush.msra.mxu0 %v1150
    %1362 = vmatpush.msra.mxu0 %v1149
    %1363 = vmatpush.msra.mxu0 %v1148
    %1364 = vmatpush.msra.mxu0 %v1147
    %1365 = vmatpush.msra.mxu0 %v1146
    %1366 = vmatpush.msra.mxu0 %v1145
    %1367 = vmatpush.msra.mxu0 %v1144
    %1368 = vmatpush.msra.mxu0 %v1143
    %1369 = vmatpush.msra.mxu0 %v1142
    %1370 = vmatpush.msra.mxu0 %v1141
    %1371 = vmatpush.msra.mxu0 %v1140
    %1372 = vmatpush.msra.mxu0 %v1139
    %1373 = vmatpush.msra.mxu0 %v1138
    %1374 = vmatpush.msra.mxu0 %v1137
    %1375 = vmatmul.f32.gmra.mxu0 %v1316
    %v1376 = vpop.f32.mrf.mxu0
    %v1377 = vadd.f32 %v1348, %v1376
    %1378 = vmatmul.f32.gmra.mxu0 %v1319
    %v1379 = vpop.f32.mrf.mxu0
    %v1380 = vadd.f32 %v1351, %v1379
    %1381 = vmatmul.f32.gmra.mxu0 %v1322
    %v1382 = vpop.f32.mrf.mxu0
    %v1383 = vadd.f32 %v1354, %v1382
    %1384 = vmatmul.f32.gmra.mxu0 %v1325
    %v1385 = vpop.f32.mrf.mxu0
    %v1386 = vadd.f32 %v1357, %v1385
    %1387 = vdwg.mxu0
    %1388 = vmatpush.msra.mxu0 %v1168
    %1389 = vmatpush.msra.mxu0 %v1167
    %1390 = vmatpush.msra.mxu0 %v1166
    %1391 = vmatpush.msra.mxu0 %v1165
    %1392 = vmatpush.msra.mxu0 %v1164
    %1393 = vmatpush.msra.mxu0 %v1163
    %1394 = vmatpush.msra.mxu0 %v1162
    %1395 = vmatpush.msra.mxu0 %v1161
    %1396 = vmatpush.msra.mxu0 %v1160
    %1397 = vmatpush.msra.mxu0 %v1159
    %1398 = vmatpush.msra.mxu0 %v1158
    %1399 = vmatpush.msra.mxu0 %v1157
    %1400 = vmatpush.msra.mxu0 %v1156
    %1401 = vmatpush.msra.mxu0 %v1155
    %1402 = vmatpush.msra.mxu0 %v1154
    %1403 = vmatpush.msra.mxu0 %v1153
    %1404 = vmatmul.f32.gmra.mxu0 %v1317
    %v1405 = vpop.f32.mrf.mxu0
    %v1406 = vadd.f32 %v1377, %v1405
    %1407 = vmatmul.f32.gmra.mxu0 %v1320
    %v1408 = vpop.f32.mrf.mxu0
    %v1409 = vadd.f32 %v1380, %v1408
    %1410 = vmatmul.f32.gmra.mxu0 %v1323
    %v1411 = vpop.f32.mrf.mxu0
    %v1412 = vadd.f32 %v1383, %v1411
    %1413 = vmatmul.f32.gmra.mxu0 %v1326
    %v1414 = vpop.f32.mrf.mxu0
    %v1415 = vadd.f32 %v1386, %v1414
    %1416 = vdwg.mxu0
    %v1417 = vmax.f32 %v1406, 0.0
    %v1418 = vmax.f32 %v1409, 0.0
    %v1419 = vmax.f32 %v1412, 0.0
    %v1420 = vmax.f32 %v1415, 0.0
    %1421 = vst.msk [vmem:[#allocation3 + $0x14] sm:$0xff] %vm63, %v1417
    %1422 = vst.msk [vmem:[#allocation3 + $0x1c] sm:$0xff] %vm63, %v1418
    %1423 = vst.msk [vmem:[#allocation3 + $0x38] sm:$0xff] %vm63, %v1419
    %1424 = vst.msk [vmem:[#allocation3 + $0x40] sm:$0xff] %vm63, %v1420
    %v1425 = vld [vmem:[#allocation3] sm:$0xff]
    %v1426 = vld [vmem:[#allocation3 + $0x8] sm:$0xff]
    %1427 = vst.msk [vmem:[#allocation4] sm:$0xff] %vm63, %v1425
    %1428 = vst.msk [vmem:[#allocation4 + $0x18] sm:$0xff] %vm63, %v1426
    %v1429 = vld [vmem:[#allocation3 + $0x24] sm:$0xff]
    %v1430 = vld [vmem:[#allocation3 + $0x2c] sm:$0xff]
    %1431 = vst.msk [vmem:[#allocation4 + $0x30] sm:$0xff] %vm63, %v1429
    %1432 = vst.msk [vmem:[#allocation4 + $0x48] sm:$0xff] %vm63, %v1430
    %v1433 = vld [vmem:[#allocation3 + $0x4] sm:$0xff]
    %v1434 = vld [vmem:[#allocation3 + $0xc] sm:$0xff]
    %1437 = vrot.lane.b32.xlu0 %v1433, 64
    %v1438 = vpop.permute.xlu0 %1437
    %1439 = vrot.lane.b32.xlu0 %v1434, 64
    %v1440 = vpop.permute.xlu0 %1439
    %1443 = vst.msk [vmem:[#allocation4] sm:$0xff] %vm924, %v1438
    %1444 = vst.msk [vmem:[#allocation4 + $0x18] sm:$0xff] %vm924, %v1440
    %v1445 = vld [vmem:[#allocation3 + $0x28] sm:$0xff]
    %v1446 = vld [vmem:[#allocation3 + $0x30] sm:$0xff]
    %1449 = vrot.lane.b32.xlu0 %v1445, 64
    %v1450 = vpop.permute.xlu0 %1449
    %1451 = vrot.lane.b32.xlu0 %v1446, 64
    %v1452 = vpop.permute.xlu0 %1451
    %1455 = vst.msk [vmem:[#allocation4 + $0x30] sm:$0xff] %vm924, %v1450
    %1456 = vst.msk [vmem:[#allocation4 + $0x48] sm:$0xff] %vm924, %v1452
    %v1457 = vld [vmem:[#allocation3 + $0x8] sm:$0xff]
    %v1458 = vld [vmem:[#allocation3 + $0x10] sm:$0xff]
    %1459 = vst.msk [vmem:[#allocation4 + $0x8] sm:$0xff] %vm63, %v1457
    %1460 = vst.msk [vmem:[#allocation4 + $0x20] sm:$0xff] %vm63, %v1458
    %v1461 = vld [vmem:[#allocation3 + $0x2c] sm:$0xff]
    %v1462 = vld [vmem:[#allocation3 + $0x34] sm:$0xff]
    %1463 = vst.msk [vmem:[#allocation4 + $0x38] sm:$0xff] %vm63, %v1461
    %1464 = vst.msk [vmem:[#allocation4 + $0x50] sm:$0xff] %vm63, %v1462
    %v1465 = vld [vmem:[#allocation3 + $0xc] sm:$0xff]
    %v1466 = vld [vmem:[#allocation3 + $0x14] sm:$0xff]
    %1469 = vrot.lane.b32.xlu0 %v1465, 64
    %v1470 = vpop.permute.xlu0 %1469
    %1471 = vrot.lane.b32.xlu0 %v1466, 64
    %v1472 = vpop.permute.xlu0 %1471
    %1475 = vst.msk [vmem:[#allocation4 + $0x8] sm:$0xff] %vm924, %v1470
    %1476 = vst.msk [vmem:[#allocation4 + $0x20] sm:$0xff] %vm924, %v1472
    %v1477 = vld [vmem:[#allocation3 + $0x30] sm:$0xff]
    %v1478 = vld [vmem:[#allocation3 + $0x38] sm:$0xff]
    %1481 = vrot.lane.b32.xlu0 %v1477, 64
    %v1482 = vpop.permute.xlu0 %1481
    %1483 = vrot.lane.b32.xlu0 %v1478, 64
    %v1484 = vpop.permute.xlu0 %1483
    %1487 = vst.msk [vmem:[#allocation4 + $0x38] sm:$0xff] %vm924, %v1482
    %1488 = vst.msk [vmem:[#allocation4 + $0x50] sm:$0xff] %vm924, %v1484
    %v1489 = vld [vmem:[#allocation3 + $0x10] sm:$0xff]
    %v1490 = vld [vmem:[#allocation3 + $0x18] sm:$0xff]
    %1491 = vst.msk [vmem:[#allocation4 + $0x10] sm:$0xff] %vm63, %v1489
    %1492 = vst.msk [vmem:[#allocation4 + $0x28] sm:$0xff] %vm63, %v1490
    %v1493 = vld [vmem:[#allocation3 + $0x34] sm:$0xff]
    %v1494 = vld [vmem:[#allocation3 + $0x3c] sm:$0xff]
    %1495 = vst.msk [vmem:[#allocation4 + $0x40] sm:$0xff] %vm63, %v1493
    %1496 = vst.msk [vmem:[#allocation4 + $0x58] sm:$0xff] %vm63, %v1494
    %v1497 = vld [vmem:[#allocation3 + $0x14] sm:$0xff]
    %v1498 = vld [vmem:[#allocation3 + $0x1c] sm:$0xff]
    %1501 = vrot.lane.b32.xlu0 %v1497, 64
    %v1502 = vpop.permute.xlu0 %1501
    %1503 = vrot.lane.b32.xlu0 %v1498, 64
    %v1504 = vpop.permute.xlu0 %1503
    %1507 = vst.msk [vmem:[#allocation4 + $0x10] sm:$0xff] %vm924, %v1502
    %1508 = vst.msk [vmem:[#allocation4 + $0x28] sm:$0xff] %vm924, %v1504
    %v1509 = vld [vmem:[#allocation3 + $0x38] sm:$0xff]
    %v1510 = vld [vmem:[#allocation3 + $0x40] sm:$0xff]
    %1513 = vrot.lane.b32.xlu0 %v1509, 64
    %v1514 = vpop.permute.xlu0 %1513
    %1515 = vrot.lane.b32.xlu0 %v1510, 64
    %v1516 = vpop.permute.xlu0 %1515
    %1519 = vst.msk [vmem:[#allocation4 + $0x40] sm:$0xff] %vm924, %v1514
    %1520 = vst.msk [vmem:[#allocation4 + $0x58] sm:$0xff] %vm924, %v1516
    %v1521 = vld [vmem:[#allocation4] sm:$0xff]
    %v1522 = vld [vmem:[#allocation4 + $0x8] sm:$0xff]
    %v1523 = vld [vmem:[#allocation4 + $0x10] sm:$0xff]
    %v1524 = vld [vmem:[#allocation4 + $0x18] sm:$0xff]
    %v1525 = vld [vmem:[#allocation4 + $0x20] sm:$0xff]
    %v1526 = vld [vmem:[#allocation4 + $0x28] sm:$0xff]
    %v1527 = vld [vmem:[#allocation4 + $0x30] sm:$0xff]
    %v1528 = vld [vmem:[#allocation4 + $0x38] sm:$0xff]
    %v1529 = vld [vmem:[#allocation4 + $0x40] sm:$0xff]
    %v1530 = vld [vmem:[#allocation4 + $0x48] sm:$0xff]
    %v1531 = vld [vmem:[#allocation4 + $0x50] sm:$0xff]
    %v1532 = vld [vmem:[#allocation4 + $0x58] sm:$0xff]
    %v1534 = vperm.slane %v1218, 0
    %1536 = vmatpush.msra.mxu0 %v1185
    %1537 = vmatpush.msra.mxu0 %v1184
    %1538 = vmatpush.msra.mxu0 %v1183
    %1539 = vmatpush.msra.mxu0 %v1182
    %1540 = vmatpush.msra.mxu0 %v1181
    %1541 = vmatpush.msra.mxu0 %v1180
    %1542 = vmatpush.msra.mxu0 %v1179
    %1543 = vmatpush.msra.mxu0 %v1178
    %1544 = vmatpush.msra.mxu0 %v1177
    %1545 = vmatpush.msra.mxu0 %v1176
    %1546 = vmatpush.msra.mxu0 %v1175
    %1547 = vmatpush.msra.mxu0 %v1174
    %1548 = vmatpush.msra.mxu0 %v1173
    %1549 = vmatpush.msra.mxu0 %v1172
    %1550 = vmatpush.msra.mxu0 %v1171
    %1551 = vmatpush.msra.mxu0 %v1170
    %1552 = vmatmul.f32.gmra.mxu0 %v1521
    %v1553 = vpop.f32.mrf.mxu0
    %v1554 = vadd.f32 %v1534, %v1553
    %1555 = vmatmul.f32.gmra.mxu0 %v1524
    %v1556 = vpop.f32.mrf.mxu0
    %v1557 = vadd.f32 %v1534, %v1556
    %1558 = vmatmul.f32.gmra.mxu0 %v1527
    %v1559 = vpop.f32.mrf.mxu0
    %v1560 = vadd.f32 %v1534, %v1559
    %1561 = vmatmul.f32.gmra.mxu0 %v1530
    %v1562 = vpop.f32.mrf.mxu0
    %v1563 = vadd.f32 %v1534, %v1562
    %1564 = vdwg.mxu0
    %1565 = vmatpush.msra.mxu0 %v1201
    %1566 = vmatpush.msra.mxu0 %v1200
    %1567 = vmatpush.msra.mxu0 %v1199
    %1568 = vmatpush.msra.mxu0 %v1198
    %1569 = vmatpush.msra.mxu0 %v1197
    %1570 = vmatpush.msra.mxu0 %v1196
    %1571 = vmatpush.msra.mxu0 %v1195
    %1572 = vmatpush.msra.mxu0 %v1194
    %1573 = vmatpush.msra.mxu0 %v1193
    %1574 = vmatpush.msra.mxu0 %v1192
    %1575 = vmatpush.msra.mxu0 %v1191
    %1576 = vmatpush.msra.mxu0 %v1190
    %1577 = vmatpush.msra.mxu0 %v1189
    %1578 = vmatpush.msra.mxu0 %v1188
    %1579 = vmatpush.msra.mxu0 %v1187
    %1580 = vmatpush.msra.mxu0 %v1186
    %1581 = vmatmul.f32.gmra.mxu0 %v1522
    %v1582 = vpop.f32.mrf.mxu0
    %v1583 = vadd.f32 %v1554, %v1582
    %1584 = vmatmul.f32.gmra.mxu0 %v1525
    %v1585 = vpop.f32.mrf.mxu0
    %v1586 = vadd.f32 %v1557, %v1585
    %1587 = vmatmul.f32.gmra.mxu0 %v1528
    %v1588 = vpop.f32.mrf.mxu0
    %v1589 = vadd.f32 %v1560, %v1588
    %1590 = vmatmul.f32.gmra.mxu0 %v1531
    %v1591 = vpop.f32.mrf.mxu0
    %v1592 = vadd.f32 %v1563, %v1591
    %1593 = vdwg.mxu0
    %1594 = vmatpush.msra.mxu0 %v1217
    %1595 = vmatpush.msra.mxu0 %v1216
    %1596 = vmatpush.msra.mxu0 %v1215
    %1597 = vmatpush.msra.mxu0 %v1214
    %1598 = vmatpush.msra.mxu0 %v1213
    %1599 = vmatpush.msra.mxu0 %v1212
    %1600 = vmatpush.msra.mxu0 %v1211
    %1601 = vmatpush.msra.mxu0 %v1210
    %1602 = vmatpush.msra.mxu0 %v1209
    %1603 = vmatpush.msra.mxu0 %v1208
    %1604 = vmatpush.msra.mxu0 %v1207
    %1605 = vmatpush.msra.mxu0 %v1206
    %1606 = vmatpush.msra.mxu0 %v1205
    %1607 = vmatpush.msra.mxu0 %v1204
    %1608 = vmatpush.msra.mxu0 %v1203
    %1609 = vmatpush.msra.mxu0 %v1202
    %1610 = vmatmul.f32.gmra.mxu0 %v1523
    %v1611 = vpop.f32.mrf.mxu0
    %v1612 = vadd.f32 %v1583, %v1611
    %1613 = vmatmul.f32.gmra.mxu0 %v1526
    %v1614 = vpop.f32.mrf.mxu0
    %v1615 = vadd.f32 %v1586, %v1614
    %1616 = vmatmul.f32.gmra.mxu0 %v1529
    %v1617 = vpop.f32.mrf.mxu0
    %v1618 = vadd.f32 %v1589, %v1617
    %1619 = vmatmul.f32.gmra.mxu0 %v1532
    %v1620 = vpop.f32.mrf.mxu0
    %v1621 = vadd.f32 %v1592, %v1620
    %1622 = vdwg.mxu0
    %v1623 = vmax.f32 %v1612, 0.0
    %v1624 = vmax.f32 %v1615, 0.0
    %v1625 = vmax.f32 %v1618, 0.0
    %v1626 = vmax.f32 %v1621, 0.0
    %1631 = vrot.lane.b32.xlu0 %v1317, 64
    %v1632 = vpop.permute.xlu0 %1631
    %1633 = vrot.lane.b32.xlu0 %v1320, 64
    %v1634 = vpop.permute.xlu0 %1633
    %1635 = vrot.lane.b32.xlu0 %v1323, 64
    %v1636 = vpop.permute.xlu0 %1635
    %1637 = vrot.lane.b32.xlu0 %v1326, 64
    %v1638 = vpop.permute.xlu0 %1637
    %v1643 = vadd.f32 %v1623, %v1632
    %v1644 = vadd.f32 %v1624, %v1634
    %v1645 = vadd.f32 %v1625, %v1636
    %v1646 = vadd.f32 %v1626, %v1638
    %v1647 = vmax.f32 %v1643, 0.0
    %v1648 = vmax.f32 %v1644, 0.0
    %v1649 = vmax.f32 %v1645, 0.0
    %v1650 = vmax.f32 %v1646, 0.0
    %1651 = vst.msk [vmem:[#allocation2 + $0x14] sm:$0xff] %vm63, %v1647
    %1652 = vst.msk [vmem:[#allocation2 + $0x1c] sm:$0xff] %vm63, %v1648
    %1653 = vst.msk [vmem:[#allocation2 + $0x38] sm:$0xff] %vm63, %v1649
    %1654 = vst.msk [vmem:[#allocation2 + $0x40] sm:$0xff] %vm63, %v1650
    %v1655 = vld [vmem:[%s17] sm:$0xff]
    %v1656 = vld [vmem:[%s17 + $0x8] sm:$0xff]
    %v1657 = vld [vmem:[%s17 + $0x10] sm:$0xff]
    %v1658 = vld [vmem:[%s17 + $0x18] sm:$0xff]
    %v1659 = vld [vmem:[%s17 + $0x20] sm:$0xff]
    %v1660 = vld [vmem:[%s17 + $0x28] sm:$0xff]
    %v1661 = vld [vmem:[%s17 + $0x30] sm:$0xff]
    %v1662 = vld [vmem:[%s17 + $0x38] sm:$0xff]
    %v1663 = vld [vmem:[%s18] sm:$0x1]
    %v1664 = vld [vmem:[#allocation2 + $0x23] sm:$0x1]
    %vm1665 = vcmask 516096
    %1666 = vst.msk [vmem:[#allocation4] sm:$0x1] %vm1665, %v1664
    %v1667 = vld [vmem:[#allocation2 + $0x47] sm:$0x1]
    %1668 = vst.msk [vmem:[#allocation4 + $0x1] sm:$0x1] %vm1665, %v1667
    %v1669 = vld [vmem:[#allocation4] sm:$0x3]
    %v1671 = vperm.slane %v1663, 0
    %v1674 = vsel %vm63, %v1669, 0
    %1676 = vmatpush.msra.mxu0 0.0
    %1677 = vmatpush.msra.mxu0 0.0
    %1678 = vmatpush.msra.mxu0 0.0
    %1679 = vmatpush.msra.mxu0 0.0
    %1680 = vmatpush.msra.mxu0 0.0
    %1681 = vmatpush.msra.mxu0 0.0
    %1682 = vmatpush.msra.mxu0 0.0
    %1683 = vmatpush.msra.mxu0 0.0
    %1684 = vmatpush.msra.mxu0 %v1662
    %1685 = vmatpush.msra.mxu0 %v1661
    %1686 = vmatpush.msra.mxu0 %v1660
    %1687 = vmatpush.msra.mxu0 %v1659
    %1688 = vmatpush.msra.mxu0 %v1658
    %1689 = vmatpush.msra.mxu0 %v1657
    %1690 = vmatpush.msra.mxu0 %v1656
    %1691 = vmatpush.msra.mxu0 %v1655
    %1692 = vmatmul.f32.gmra.mxu0 %v1674
    %v1693 = vpop.f32.mrf.mxu0
    %v1694 = vadd.f32 %v1671, %v1693
    %1695 = vdwg.mxu0
    %v1696 = vmax.f32 %v1694, 0.0
    %vm1697 = vcmask 17408
    %1698 = vst.msk [vmem:[#allocation5] sm:$0x3] %vm1697, %v1696
    // Predicated region
    $region78: #{forward.1} parent=1 // pred_check
      _
    $region79: #{forward.1} parent=1 // pred_check_branch
      %1700 = sbr.rel (0) target = $region81
    $region80: #{forward.1} parent=1 // pred_region
      %1702 = vsyncadd [#allocation6], 0
      %s1704 = sshll.u32 [#allocation5], 4
      %s1705 = int_to_ptr.vmem [resolvable:$true] %s1704
      %s1706 = sshll.u32 %s19, 4
      %s1707 = int_to_ptr.hbm [resolvable:$true] %s1706
      %1709 = dma.vmem_to_hbm [thread:$0]  %s1705, 32, %s1707, [#allocation6]
    $region81: #{forward.1} parent=1 // pred_fallthru
      _
    // Predicated region
    $region82: #{forward.1} parent=1 // pred_check
      _
    $region83: #{forward.1} parent=1 // pred_check_branch
      %1711 = sbr.rel (0) target = $region85
    $region84: #{forward.1} parent=1 // pred_region
      %1713 = dma.done [#allocation6], 32
    $region85: #{forward.1} parent=1 // pred_fallthru
      _
    %1714 = vsyncpa [#allocation6], 1

</llo_original>
